<compile_context>
chip_gen: v7x
topology: tpu7x:2x2x1
jax: 0.10.0
libtpu: 0.0.40
codegen_flags: <defaults>
</compile_context>

<pallas_src>
import math
import numpy as np
import jax
import jax.numpy as jnp
from jax.experimental import pallas as pl
from jax.experimental.pallas import tpu as pltpu

# ---------------- config (small shapes consistent with the module) ----------------
B, S = 2, 8
DIM = 64
N_HEADS = 4
N_KV_HEADS = 2
HEAD_DIM = DIM // N_HEADS            # 16
N_REP = N_HEADS // N_KV_HEADS        # 2
DQ = N_HEADS * HEAD_DIM              # 64
DKV = N_KV_HEADS * HEAD_DIM          # 32
QKV_W = DQ + 2 * DKV                 # 128  (lane-dense fused q|k|v width)
MULTIPLE_OF = 64
FFN_HIDDEN = MULTIPLE_OF * ((int(2 * DIM / 3) + MULTIPLE_OF - 1) // MULTIPLE_OF)  # 64
EPS = 1e-5
START_POS = 0
ROPE_THETA = 10000.0
SM_SCALE = 1.0 / math.sqrt(HEAD_DIM)
BS = B * S


# ---------------- fused kernel (whole block, one grid step) ----------------
def _encoder_block_kernel(x_ref, nw_ref, wqkv_ref, wo_ref, w13_ref, w2_ref,
                          rope_ref, o_ref):
    x = x_ref[...]                                        # (BS, DIM)
    nw = nw_ref[...]                                      # (2, DIM)

    # --- attention RMSNorm ---
    xn = x * jax.lax.rsqrt(jnp.mean(x * x, axis=-1, keepdims=True) + EPS) * nw[0:1, :]

    # --- fused q|k|v projection: one N=128 lane-dense matmul ---
    qkv = jnp.dot(xn, wqkv_ref[...], preferred_element_type=jnp.float32)  # (BS, 128)

    # --- fused interleaved RoPE over the q|k lanes (v lanes pass through).
    #     pair-swap via two lane rolls (XLU); the per-pair sign, the softmax
    #     scale (q lanes) and the v pass-through (cos=1, sin=0) are all folded
    #     into the precomputed tables.
    cos_t = rope_ref[0]                                   # (BS, 128)
    sin_nxt = rope_ref[1]                                 # nonzero on even lanes -> pairs with x[lane+1]
    sin_prv = rope_ref[2]                                 # nonzero on odd  lanes -> pairs with x[lane-1]
    qkv = (qkv * cos_t
           + pltpu.roll(qkv, shift=QKV_W - 1, axis=1) * sin_nxt   # brings x[lane+1]
           + pltpu.roll(qkv, shift=1, axis=1) * sin_prv)          # brings x[lane-1]

    # --- attention, per batch element, grouped by KV head (GQA) ---
    attn_rows = []
    for b in range(B):                                    # unrolled (B = 2)
        rows = qkv[b * S:(b + 1) * S, :]                  # (S, 128), sublane-aligned
        head_outs = []
        for kv in range(N_KV_HEADS):                      # unrolled (2)
            k_h = rows[:, DQ + kv * HEAD_DIM: DQ + (kv + 1) * HEAD_DIM]              # (S, hd)
            v_h = rows[:, DQ + DKV + kv * HEAD_DIM: DQ + DKV + (kv + 1) * HEAD_DIM]  # (S, hd)
            # stack the N_REP query heads of this KV group along sublanes -> M = 2S
            q_grp = jnp.concatenate(
                [rows[:, (kv * N_REP + r) * HEAD_DIM:(kv * N_REP + r + 1) * HEAD_DIM]
                 for r in range(N_REP)], axis=0)          # (2S, hd), q already * 1/sqrt(hd)
            s = jax.lax.dot_general(q_grp, k_h, (((1,), (1,)), ((), ())),
                                    preferred_element_type=jnp.float32)              # (2S, S)
            e = jnp.exp(s - jnp.max(s, axis=-1, keepdims=True))
            p = e / jnp.sum(e, axis=-1, keepdims=True)     # normalize before PV matmul
            o_grp = jnp.dot(p, v_h, preferred_element_type=jnp.float32)              # (2S, hd)
            head_outs += [o_grp[r * S:(r + 1) * S, :] for r in range(N_REP)]
        attn_rows.append(jnp.concatenate(head_outs, axis=1))                         # (S, DQ)
    attn = jnp.concatenate(attn_rows, axis=0)              # (BS, DQ)

    # --- single wo projection + single residual add ---
    h = x + jnp.dot(attn, wo_ref[...], preferred_element_type=jnp.float32)           # (BS, DIM)

    # --- ffn RMSNorm + SwiGLU (no second residual, matching the reference forward) ---
    hn = h * jax.lax.rsqrt(jnp.mean(h * h, axis=-1, keepdims=True) + EPS) * nw[1:2, :]
    gu = jnp.dot(hn, w13_ref[...], preferred_element_type=jnp.float32)               # (BS, 2*FFN)
    g = gu[:, :FFN_HIDDEN]
    u = gu[:, FFN_HIDDEN:]
    o_ref[...] = jnp.dot(g * jax.nn.sigmoid(g) * u, w2_ref[...],
                         preferred_element_type=jnp.float32)


# ---------------- wrapper ----------------
def encoder_block(x, params, rope_tab):
    x2d = x.reshape(BS, DIM)
    full2 = lambda i: (0, 0)
    full3 = lambda i: (0, 0, 0)
    out = pl.pallas_call(
        _encoder_block_kernel,
        out_shape=jax.ShapeDtypeStruct((BS, DIM), jnp.float32),
        grid=(1,),
        in_specs=[
            pl.BlockSpec((BS, DIM), full2),               # x (batch merged into rows)
            pl.BlockSpec((2, DIM), full2),                # [attn_norm_w ; ffn_norm_w]
            pl.BlockSpec((DIM, QKV_W), full2),            # wq | wk | wv
            pl.BlockSpec((DQ, DIM), full2),               # wo
            pl.BlockSpec((DIM, 2 * FFN_HIDDEN), full2),   # w1 | w3
            pl.BlockSpec((FFN_HIDDEN, DIM), full2),       # w2
            pl.BlockSpec((3, BS, QKV_W), full3),          # rope tables [cos, sin_next, sin_prev]
        ],
        out_specs=pl.BlockSpec((BS, DIM), full2),
        compiler_params=pltpu.CompilerParams(dimension_semantics=("arbitrary",)),
    )(x2d, params["norm_w"], params["wqkv"], params["wo"],
      params["w13"], params["w2"], rope_tab)
    return out.reshape(B, S, DIM)


# ---------------- deterministic parameter / rope-table construction ----------------
def init_params(key):
    ks = jax.random.split(key, 7)
    scale = 0.05

    def lin(k, din, dout):
        return scale * jax.random.normal(k, (din, dout), jnp.float32)

    wq = lin(ks[0], DIM, DQ)
    wk = lin(ks[1], DIM, DKV)
    wv = lin(ks[2], DIM, DKV)
    wo = lin(ks[3], DQ, DIM)
    w1 = lin(ks[4], DIM, FFN_HIDDEN)
    w3 = lin(ks[5], DIM, FFN_HIDDEN)
    w2 = lin(ks[6], FFN_HIDDEN, DIM)
    # TODO(synk): at production DIM these should be bf16 (f32 MXU accumulation)
    #             and K-tiled; kept f32 here for tight parity at toy shapes.
    return dict(
        wq=wq, wk=wk, wv=wv, wo=wo, w1=w1, w3=w3, w2=w2,
        wqkv=jnp.concatenate([wq, wk, wv], axis=1),         # (DIM, 128)
        w13=jnp.concatenate([w1, w3], axis=1),               # (DIM, 128)
        norm_w=jnp.ones((2, DIM), jnp.float32),               # row0=attn, row1=ffn
    )


def make_rope_tables(seq_len, start_pos):
    """Precompute (once, in numpy) the fused-QKV RoPE tables.

    Lane layout of the fused qkv output: [q(64) | k(32) | v(32)].
    The kernel computes  qkv*cos + roll(qkv,+1 over lanes)*sin_next
                                 + roll(qkv,-1 over lanes)*sin_prev
    (interleaved pair-swap).  sin_next is nonzero only on even lanes (value -sin),
    sin_prev only on odd lanes (value +sin); v lanes get cos=1, sin=0 (identity);
    q lanes additionally carry the 1/sqrt(head_dim) softmax scale."""
    theta = ROPE_THETA ** (-np.arange(0, HEAD_DIM, 2, dtype=np.float32) / HEAD_DIM)
    pos = np.arange(start_pos, start_pos + seq_len, dtype=np.float32)
    ang = np.outer(pos, theta)                              # (S, hd//2)
    cos_h, sin_h = np.cos(ang), np.sin(ang)                 # (S, hd//2)
    cos_full = np.repeat(cos_h, 2, axis=-1)                 # (S, hd) [c0,c0,c1,c1,...]
    sin_full = np.repeat(sin_h, 2, axis=-1)
    even = np.zeros(HEAD_DIM, np.float32); even[0::2] = 1.0
    odd = np.zeros(HEAD_DIM, np.float32); odd[1::2] = 1.0
    sin_next_h = -sin_full * even                           # even lanes: -sin, odd lanes: 0
    sin_prev_h = sin_full * odd                             # odd lanes: +sin, even lanes: 0

    def lanes(tab_h, v_fill):
        return np.concatenate(
            [np.tile(tab_h, (1, N_HEADS)) * SM_SCALE,       # q lanes (scaled)
             np.tile(tab_h, (1, N_KV_HEADS)),               # k lanes
             np.full((seq_len, DKV), v_fill, np.float32)],  # v lanes (identity)
            axis=1)                                         # (S, 128)

    rope = np.stack([lanes(cos_full, 1.0),
                     lanes(sin_next_h, 0.0),
                     lanes(sin_prev_h, 0.0)], axis=0)       # (3, S, 128)
    rope = np.tile(rope, (1, B, 1))                         # (3, B*S, 128), batch-stacked rows
    return jnp.asarray(rope), jnp.asarray(cos_h), jnp.asarray(sin_h)


# ---------------- pure-JAX reference (for correctness check) ----------------
def _rmsnorm_ref(x, w):
    return x * jax.lax.rsqrt(jnp.mean(x * x, axis=-1, keepdims=True) + EPS) * w


def _rope_ref(t, n_heads, cos_half, sin_half):
    b, s, _ = t.shape
    t4 = t.reshape(b, s, n_heads, HEAD_DIM // 2, 2)
    tr, ti = t4[..., 0], t4[..., 1]
    c = cos_half[None, :, None, :]
    sn = sin_half[None, :, None, :]
    return jnp.stack([tr * c - ti * sn, tr * sn + ti * c],
                     axis=-1).reshape(b, s, n_heads * HEAD_DIM)


def encoder_block_ref(x, params, cos_half, sin_half):
    xn = _rmsnorm_ref(x, params["norm_w"][0])
    xq = _rope_ref(xn @ params["wq"], N_HEADS, cos_half, sin_half)
    xk = _rope_ref(xn @ params["wk"], N_KV_HEADS, cos_half, sin_half)
    xv = xn @ params["wv"]
    q = xq.reshape(B, S, N_HEADS, HEAD_DIM).transpose(0, 2, 1, 3)
    k = jnp.repeat(xk.reshape(B, S, N_KV_HEADS, HEAD_DIM), N_REP, axis=2).transpose(0, 2, 1, 3)
    v = jnp.repeat(xv.reshape(B, S, N_KV_HEADS, HEAD_DIM), N_REP, axis=2).transpose(0, 2, 1, 3)
    scores = jnp.einsum("bhqd,bhkd->bhqk", q, k) / math.sqrt(HEAD_DIM)
    p = jax.nn.softmax(scores, axis=-1)
    o = jnp.einsum("bhqk,bhkd->bhqd", p, v).transpose(0, 2, 1, 3).reshape(B, S, DQ)
    h = x + o @ params["wo"]
    hn = _rmsnorm_ref(h, params["norm_w"][1])
    g = hn @ params["w1"]
    return (jax.nn.silu(g) * (hn @ params["w3"])) @ params["w2"]


if __name__ == "__main__":
    key = jax.random.PRNGKey(0)
    pkey, xkey = jax.random.split(key)
    params = init_params(pkey)
    x = jax.random.normal(xkey, (B, S, DIM), jnp.float32)
    rope_tab, cos_half, sin_half = make_rope_tables(S, START_POS)

    out = jax.jit(encoder_block)(x, params, rope_tab)
    out = jax.block_until_ready(out)

    ref = encoder_block_ref(x, params, cos_half, sin_half)
    assert out.shape == (B, S, DIM)
    err = float(jnp.max(jnp.abs(out - ref)))
    assert jnp.allclose(out, ref, rtol=1e-3, atol=1e-3), err
    print("KERNEL_OK")
</pallas_src>

<mosaic_0001>
module attributes {stable_mosaic.version = 11 : i64} {
  func.func @_encoder_block_kernel(%arg0: i32, %arg1: memref<16x64xf32, #tpu.memory_space<vmem>>, %arg2: memref<2x64xf32, #tpu.memory_space<vmem>>, %arg3: memref<64x128xf32, #tpu.memory_space<vmem>>, %arg4: memref<64x64xf32, #tpu.memory_space<vmem>>, %arg5: memref<64x128xf32, #tpu.memory_space<vmem>>, %arg6: memref<64x64xf32, #tpu.memory_space<vmem>>, %arg7: memref<3x16x128xf32, #tpu.memory_space<vmem>>, %arg8: memref<16x64xf32, #tpu.memory_space<vmem>>) attributes {dimension_semantics = [#tpu.dimension_semantics<arbitrary>], iteration_bounds = array<i64: 1>, scalar_prefetch = 0 : i64, scratch_operands = 0 : i64, tpu.core_type = #tpu.core_type<tc>, window_params = [{pipeline_mode = #tpu.pipeline_mode<synchronous>, transform_indices = @transform_0, window_bounds = array<i64: 16, 64>}, {pipeline_mode = #tpu.pipeline_mode<synchronous>, transform_indices = @transform_1, window_bounds = array<i64: 2, 64>}, {pipeline_mode = #tpu.pipeline_mode<synchronous>, transform_indices = @transform_2, window_bounds = array<i64: 64, 128>}, {pipeline_mode = #tpu.pipeline_mode<synchronous>, transform_indices = @transform_3, window_bounds = array<i64: 64, 64>}, {pipeline_mode = #tpu.pipeline_mode<synchronous>, transform_indices = @transform_4, window_bounds = array<i64: 64, 128>}, {pipeline_mode = #tpu.pipeline_mode<synchronous>, transform_indices = @transform_5, window_bounds = array<i64: 64, 64>}, {pipeline_mode = #tpu.pipeline_mode<synchronous>, transform_indices = @transform_6, window_bounds = array<i64: 3, 16, 128>}, {pipeline_mode = #tpu.pipeline_mode<synchronous>, transform_indices = @transform_7, window_bounds = array<i64: 16, 64>}]} {
    %c0 = arith.constant 0 : index
    %c0_0 = arith.constant 0 : index
    %0 = vector.load %arg1[%c0, %c0_0] : memref<16x64xf32, #tpu.memory_space<vmem>>, vector<16x64xf32>
    %c0_1 = arith.constant 0 : index
    %c0_2 = arith.constant 0 : index
    %1 = vector.load %arg2[%c0_1, %c0_2] : memref<2x64xf32, #tpu.memory_space<vmem>>, vector<2x64xf32>
    %2 = arith.mulf %0, %0 : vector<16x64xf32>
    %cst = arith.constant dense<0.000000e+00> : vector<16xf32>
    %3 = vector.multi_reduction <add>, %2, %cst [1] : vector<16x64xf32> to vector<16xf32>
    %4 = vector.shape_cast %3 : vector<16xf32> to vector<16x1xf32>
    %cst_3 = arith.constant 6.400000e+01 : f32
    %5 = vector.broadcast %cst_3 : f32 to vector<16x1xf32>
    %6 = arith.divf %4, %5 : vector<16x1xf32>
    %cst_4 = arith.constant 9.99999974E-6 : f32
    %7 = vector.broadcast %cst_4 : f32 to vector<16x1xf32>
    %8 = arith.addf %6, %7 : vector<16x1xf32>
    %9 = math.rsqrt %8 : vector<16x1xf32>
    %10 = vector.broadcast %9 : vector<16x1xf32> to vector<16x64xf32>
    %11 = arith.mulf %0, %10 : vector<16x64xf32>
    %12 = vector.extract_strided_slice %1 {offsets = [0, 0], sizes = [1, 64], strides = [1, 1]} : vector<2x64xf32> to vector<1x64xf32>
    %13 = vector.broadcast %12 : vector<1x64xf32> to vector<16x64xf32>
    %14 = arith.mulf %11, %13 : vector<16x64xf32>
    %c0_5 = arith.constant 0 : index
    %c0_6 = arith.constant 0 : index
    %15 = vector.load %arg3[%c0_5, %c0_6] : memref<64x128xf32, #tpu.memory_space<vmem>>, vector<64x128xf32>
    %cst_7 = arith.constant dense<0.000000e+00> : vector<16x128xf32>
    %16 = tpu.matmul %14, %15, %cst_7 {dimension_numbers = #tpu.dot_dimension_numbers<[1], [0], [0], [1], [0, 0, 1, 1], [], []>} : vector<16x64xf32>, vector<64x128xf32>, vector<16x128xf32> -> vector<16x128xf32>
    %c0_8 = arith.constant 0 : index
    %c0_9 = arith.constant 0 : index
    %c0_10 = arith.constant 0 : index
    %17 = vector.load %arg7[%c0_8, %c0_9, %c0_10] : memref<3x16x128xf32, #tpu.memory_space<vmem>>, vector<1x16x128xf32>
    %18 = vector.shape_cast %17 : vector<1x16x128xf32> to vector<16x128xf32>
    %c1 = arith.constant 1 : index
    %c0_11 = arith.constant 0 : index
    %c0_12 = arith.constant 0 : index
    %19 = vector.load %arg7[%c1, %c0_11, %c0_12] : memref<3x16x128xf32, #tpu.memory_space<vmem>>, vector<1x16x128xf32>
    %20 = vector.shape_cast %19 : vector<1x16x128xf32> to vector<16x128xf32>
    %c2 = arith.constant 2 : index
    %c0_13 = arith.constant 0 : index
    %c0_14 = arith.constant 0 : index
    %21 = vector.load %arg7[%c2, %c0_13, %c0_14] : memref<3x16x128xf32, #tpu.memory_space<vmem>>, vector<1x16x128xf32>
    %22 = vector.shape_cast %21 : vector<1x16x128xf32> to vector<16x128xf32>
    %23 = arith.mulf %16, %18 : vector<16x128xf32>
    %c127_i32 = arith.constant 127 : i32
    %24 = tpu.dynamic_rotate %16 by %c127_i32 dim 1 : vector<16x128xf32>, i32 -> vector<16x128xf32>
    %25 = arith.mulf %24, %20 : vector<16x128xf32>
    %26 = arith.addf %23, %25 : vector<16x128xf32>
    %c1_i32 = arith.constant 1 : i32
    %27 = tpu.dynamic_rotate %16 by %c1_i32 dim 1 : vector<16x128xf32>, i32 -> vector<16x128xf32>
    %28 = arith.mulf %27, %22 : vector<16x128xf32>
    %29 = arith.addf %26, %28 : vector<16x128xf32>
    %30 = vector.extract_strided_slice %29 {offsets = [0, 0], sizes = [8, 128], strides = [1, 1]} : vector<16x128xf32> to vector<8x128xf32>
    %31 = vector.extract_strided_slice %30 {offsets = [0, 64], sizes = [8, 16], strides = [1, 1]} : vector<8x128xf32> to vector<8x16xf32>
    %32 = vector.extract_strided_slice %30 {offsets = [0, 96], sizes = [8, 16], strides = [1, 1]} : vector<8x128xf32> to vector<8x16xf32>
    %33 = vector.extract_strided_slice %30 {offsets = [0, 0], sizes = [8, 16], strides = [1, 1]} : vector<8x128xf32> to vector<8x16xf32>
    %34 = vector.extract_strided_slice %30 {offsets = [0, 16], sizes = [8, 16], strides = [1, 1]} : vector<8x128xf32> to vector<8x16xf32>
    %35 = tpu.concatenate %33, %34 in 0 : vector<8x16xf32>, vector<8x16xf32> -> vector<16x16xf32>
    %cst_15 = arith.constant dense<0.000000e+00> : vector<16x8xf32>
    %36 = tpu.matmul %35, %31, %cst_15 {dimension_numbers = #tpu.dot_dimension_numbers<[1], [1], [0], [0], [0, 0, 1, 0], [], []>} : vector<16x16xf32>, vector<8x16xf32>, vector<16x8xf32> -> vector<16x8xf32>
    %cst_16 = arith.constant dense<0xFF800000> : vector<16xf32>
    %37 = vector.multi_reduction <maximumf>, %36, %cst_16 [1] : vector<16x8xf32> to vector<16xf32>
    %38 = vector.shape_cast %37 : vector<16xf32> to vector<16x1xf32>
    %39 = vector.broadcast %38 : vector<16x1xf32> to vector<16x8xf32>
    %40 = arith.subf %36, %39 : vector<16x8xf32>
    %41 = math.exp %40 : vector<16x8xf32>
    %cst_17 = arith.constant dense<0.000000e+00> : vector<16xf32>
    %42 = vector.multi_reduction <add>, %41, %cst_17 [1] : vector<16x8xf32> to vector<16xf32>
    %43 = vector.shape_cast %42 : vector<16xf32> to vector<16x1xf32>
    %44 = vector.broadcast %43 : vector<16x1xf32> to vector<16x8xf32>
    %45 = arith.divf %41, %44 : vector<16x8xf32>
    %cst_18 = arith.constant dense<0.000000e+00> : vector<16x16xf32>
    %46 = tpu.matmul %45, %32, %cst_18 {dimension_numbers = #tpu.dot_dimension_numbers<[1], [0], [0], [1], [0, 0, 1, 1], [], []>} : vector<16x8xf32>, vector<8x16xf32>, vector<16x16xf32> -> vector<16x16xf32>
    %47 = vector.extract_strided_slice %46 {offsets = [0, 0], sizes = [8, 16], strides = [1, 1]} : vector<16x16xf32> to vector<8x16xf32>
    %48 = vector.extract_strided_slice %46 {offsets = [8, 0], sizes = [8, 16], strides = [1, 1]} : vector<16x16xf32> to vector<8x16xf32>
    %49 = vector.extract_strided_slice %30 {offsets = [0, 80], sizes = [8, 16], strides = [1, 1]} : vector<8x128xf32> to vector<8x16xf32>
    %50 = vector.extract_strided_slice %30 {offsets = [0, 112], sizes = [8, 16], strides = [1, 1]} : vector<8x128xf32> to vector<8x16xf32>
    %51 = vector.extract_strided_slice %30 {offsets = [0, 32], sizes = [8, 16], strides = [1, 1]} : vector<8x128xf32> to vector<8x16xf32>
    %52 = vector.extract_strided_slice %30 {offsets = [0, 48], sizes = [8, 16], strides = [1, 1]} : vector<8x128xf32> to vector<8x16xf32>
    %53 = tpu.concatenate %51, %52 in 0 : vector<8x16xf32>, vector<8x16xf32> -> vector<16x16xf32>
    %cst_19 = arith.constant dense<0.000000e+00> : vector<16x8xf32>
    %54 = tpu.matmul %53, %49, %cst_19 {dimension_numbers = #tpu.dot_dimension_numbers<[1], [1], [0], [0], [0, 0, 1, 0], [], []>} : vector<16x16xf32>, vector<8x16xf32>, vector<16x8xf32> -> vector<16x8xf32>
    %cst_20 = arith.constant dense<0xFF800000> : vector<16xf32>
    %55 = vector.multi_reduction <maximumf>, %54, %cst_20 [1] : vector<16x8xf32> to vector<16xf32>
    %56 = vector.shape_cast %55 : vector<16xf32> to vector<16x1xf32>
    %57 = vector.broadcast %56 : vector<16x1xf32> to vector<16x8xf32>
    %58 = arith.subf %54, %57 : vector<16x8xf32>
    %59 = math.exp %58 : vector<16x8xf32>
    %cst_21 = arith.constant dense<0.000000e+00> : vector<16xf32>
    %60 = vector.multi_reduction <add>, %59, %cst_21 [1] : vector<16x8xf32> to vector<16xf32>
    %61 = vector.shape_cast %60 : vector<16xf32> to vector<16x1xf32>
    %62 = vector.broadcast %61 : vector<16x1xf32> to vector<16x8xf32>
    %63 = arith.divf %59, %62 : vector<16x8xf32>
    %cst_22 = arith.constant dense<0.000000e+00> : vector<16x16xf32>
    %64 = tpu.matmul %63, %50, %cst_22 {dimension_numbers = #tpu.dot_dimension_numbers<[1], [0], [0], [1], [0, 0, 1, 1], [], []>} : vector<16x8xf32>, vector<8x16xf32>, vector<16x16xf32> -> vector<16x16xf32>
    %65 = vector.extract_strided_slice %64 {offsets = [0, 0], sizes = [8, 16], strides = [1, 1]} : vector<16x16xf32> to vector<8x16xf32>
    %66 = vector.extract_strided_slice %64 {offsets = [8, 0], sizes = [8, 16], strides = [1, 1]} : vector<16x16xf32> to vector<8x16xf32>
    %67 = tpu.concatenate %47, %48, %65, %66 in 1 : vector<8x16xf32>, vector<8x16xf32>, vector<8x16xf32>, vector<8x16xf32> -> vector<8x64xf32>
    %68 = vector.extract_strided_slice %29 {offsets = [8, 0], sizes = [8, 128], strides = [1, 1]} : vector<16x128xf32> to vector<8x128xf32>
    %69 = vector.extract_strided_slice %68 {offsets = [0, 64], sizes = [8, 16], strides = [1, 1]} : vector<8x128xf32> to vector<8x16xf32>
    %70 = vector.extract_strided_slice %68 {offsets = [0, 96], sizes = [8, 16], strides = [1, 1]} : vector<8x128xf32> to vector<8x16xf32>
    %71 = vector.extract_strided_slice %68 {offsets = [0, 0], sizes = [8, 16], strides = [1, 1]} : vector<8x128xf32> to vector<8x16xf32>
    %72 = vector.extract_strided_slice %68 {offsets = [0, 16], sizes = [8, 16], strides = [1, 1]} : vector<8x128xf32> to vector<8x16xf32>
    %73 = tpu.concatenate %71, %72 in 0 : vector<8x16xf32>, vector<8x16xf32> -> vector<16x16xf32>
    %cst_23 = arith.constant dense<0.000000e+00> : vector<16x8xf32>
    %74 = tpu.matmul %73, %69, %cst_23 {dimension_numbers = #tpu.dot_dimension_numbers<[1], [1], [0], [0], [0, 0, 1, 0], [], []>} : vector<16x16xf32>, vector<8x16xf32>, vector<16x8xf32> -> vector<16x8xf32>
    %cst_24 = arith.constant dense<0xFF800000> : vector<16xf32>
    %75 = vector.multi_reduction <maximumf>, %74, %cst_24 [1] : vector<16x8xf32> to vector<16xf32>
    %76 = vector.shape_cast %75 : vector<16xf32> to vector<16x1xf32>
    %77 = vector.broadcast %76 : vector<16x1xf32> to vector<16x8xf32>
    %78 = arith.subf %74, %77 : vector<16x8xf32>
    %79 = math.exp %78 : vector<16x8xf32>
    %cst_25 = arith.constant dense<0.000000e+00> : vector<16xf32>
    %80 = vector.multi_reduction <add>, %79, %cst_25 [1] : vector<16x8xf32> to vector<16xf32>
    %81 = vector.shape_cast %80 : vector<16xf32> to vector<16x1xf32>
    %82 = vector.broadcast %81 : vector<16x1xf32> to vector<16x8xf32>
    %83 = arith.divf %79, %82 : vector<16x8xf32>
    %cst_26 = arith.constant dense<0.000000e+00> : vector<16x16xf32>
    %84 = tpu.matmul %83, %70, %cst_26 {dimension_numbers = #tpu.dot_dimension_numbers<[1], [0], [0], [1], [0, 0, 1, 1], [], []>} : vector<16x8xf32>, vector<8x16xf32>, vector<16x16xf32> -> vector<16x16xf32>
    %85 = vector.extract_strided_slice %84 {offsets = [0, 0], sizes = [8, 16], strides = [1, 1]} : vector<16x16xf32> to vector<8x16xf32>
    %86 = vector.extract_strided_slice %84 {offsets = [8, 0], sizes = [8, 16], strides = [1, 1]} : vector<16x16xf32> to vector<8x16xf32>
    %87 = vector.extract_strided_slice %68 {offsets = [0, 80], sizes = [8, 16], strides = [1, 1]} : vector<8x128xf32> to vector<8x16xf32>
    %88 = vector.extract_strided_slice %68 {offsets = [0, 112], sizes = [8, 16], strides = [1, 1]} : vector<8x128xf32> to vector<8x16xf32>
    %89 = vector.extract_strided_slice %68 {offsets = [0, 32], sizes = [8, 16], strides = [1, 1]} : vector<8x128xf32> to vector<8x16xf32>
    %90 = vector.extract_strided_slice %68 {offsets = [0, 48], sizes = [8, 16], strides = [1, 1]} : vector<8x128xf32> to vector<8x16xf32>
    %91 = tpu.concatenate %89, %90 in 0 : vector<8x16xf32>, vector<8x16xf32> -> vector<16x16xf32>
    %cst_27 = arith.constant dense<0.000000e+00> : vector<16x8xf32>
    %92 = tpu.matmul %91, %87, %cst_27 {dimension_numbers = #tpu.dot_dimension_numbers<[1], [1], [0], [0], [0, 0, 1, 0], [], []>} : vector<16x16xf32>, vector<8x16xf32>, vector<16x8xf32> -> vector<16x8xf32>
    %cst_28 = arith.constant dense<0xFF800000> : vector<16xf32>
    %93 = vector.multi_reduction <maximumf>, %92, %cst_28 [1] : vector<16x8xf32> to vector<16xf32>
    %94 = vector.shape_cast %93 : vector<16xf32> to vector<16x1xf32>
    %95 = vector.broadcast %94 : vector<16x1xf32> to vector<16x8xf32>
    %96 = arith.subf %92, %95 : vector<16x8xf32>
    %97 = math.exp %96 : vector<16x8xf32>
    %cst_29 = arith.constant dense<0.000000e+00> : vector<16xf32>
    %98 = vector.multi_reduction <add>, %97, %cst_29 [1] : vector<16x8xf32> to vector<16xf32>
    %99 = vector.shape_cast %98 : vector<16xf32> to vector<16x1xf32>
    %100 = vector.broadcast %99 : vector<16x1xf32> to vector<16x8xf32>
    %101 = arith.divf %97, %100 : vector<16x8xf32>
    %cst_30 = arith.constant dense<0.000000e+00> : vector<16x16xf32>
    %102 = tpu.matmul %101, %88, %cst_30 {dimension_numbers = #tpu.dot_dimension_numbers<[1], [0], [0], [1], [0, 0, 1, 1], [], []>} : vector<16x8xf32>, vector<8x16xf32>, vector<16x16xf32> -> vector<16x16xf32>
    %103 = vector.extract_strided_slice %102 {offsets = [0, 0], sizes = [8, 16], strides = [1, 1]} : vector<16x16xf32> to vector<8x16xf32>
    %104 = vector.extract_strided_slice %102 {offsets = [8, 0], sizes = [8, 16], strides = [1, 1]} : vector<16x16xf32> to vector<8x16xf32>
    %105 = tpu.concatenate %85, %86, %103, %104 in 1 : vector<8x16xf32>, vector<8x16xf32>, vector<8x16xf32>, vector<8x16xf32> -> vector<8x64xf32>
    %106 = tpu.concatenate %67, %105 in 0 : vector<8x64xf32>, vector<8x64xf32> -> vector<16x64xf32>
    %c0_31 = arith.constant 0 : index
    %c0_32 = arith.constant 0 : index
    %107 = vector.load %arg4[%c0_31, %c0_32] : memref<64x64xf32, #tpu.memory_space<vmem>>, vector<64x64xf32>
    %cst_33 = arith.constant dense<0.000000e+00> : vector<16x64xf32>
    %108 = tpu.matmul %106, %107, %cst_33 {dimension_numbers = #tpu.dot_dimension_numbers<[1], [0], [0], [1], [0, 0, 1, 1], [], []>} : vector<16x64xf32>, vector<64x64xf32>, vector<16x64xf32> -> vector<16x64xf32>
    %109 = arith.addf %0, %108 : vector<16x64xf32>
    %110 = arith.mulf %109, %109 : vector<16x64xf32>
    %cst_34 = arith.constant dense<0.000000e+00> : vector<16xf32>
    %111 = vector.multi_reduction <add>, %110, %cst_34 [1] : vector<16x64xf32> to vector<16xf32>
    %112 = vector.shape_cast %111 : vector<16xf32> to vector<16x1xf32>
    %cst_35 = arith.constant 6.400000e+01 : f32
    %113 = vector.broadcast %cst_35 : f32 to vector<16x1xf32>
    %114 = arith.divf %112, %113 : vector<16x1xf32>
    %cst_36 = arith.constant 9.99999974E-6 : f32
    %115 = vector.broadcast %cst_36 : f32 to vector<16x1xf32>
    %116 = arith.addf %114, %115 : vector<16x1xf32>
    %117 = math.rsqrt %116 : vector<16x1xf32>
    %118 = vector.broadcast %117 : vector<16x1xf32> to vector<16x64xf32>
    %119 = arith.mulf %109, %118 : vector<16x64xf32>
    %120 = vector.extract_strided_slice %1 {offsets = [1, 0], sizes = [1, 64], strides = [1, 1]} : vector<2x64xf32> to vector<1x64xf32>
    %121 = vector.broadcast %120 : vector<1x64xf32> to vector<16x64xf32>
    %122 = arith.mulf %119, %121 : vector<16x64xf32>
    %c0_37 = arith.constant 0 : index
    %c0_38 = arith.constant 0 : index
    %123 = vector.load %arg5[%c0_37, %c0_38] : memref<64x128xf32, #tpu.memory_space<vmem>>, vector<64x128xf32>
    %cst_39 = arith.constant dense<0.000000e+00> : vector<16x128xf32>
    %124 = tpu.matmul %122, %123, %cst_39 {dimension_numbers = #tpu.dot_dimension_numbers<[1], [0], [0], [1], [0, 0, 1, 1], [], []>} : vector<16x64xf32>, vector<64x128xf32>, vector<16x128xf32> -> vector<16x128xf32>
    %125 = vector.extract_strided_slice %124 {offsets = [0, 0], sizes = [16, 64], strides = [1, 1]} : vector<16x128xf32> to vector<16x64xf32>
    %126 = vector.extract_strided_slice %124 {offsets = [0, 64], sizes = [16, 64], strides = [1, 1]} : vector<16x128xf32> to vector<16x64xf32>
    %127 = arith.negf %125 : vector<16x64xf32>
    %128 = math.exp %127 : vector<16x64xf32>
    %cst_40 = arith.constant 1.000000e+00 : f32
    %129 = vector.broadcast %cst_40 : f32 to vector<16x64xf32>
    %130 = arith.addf %129, %128 : vector<16x64xf32>
    %131 = arith.divf %129, %130 : vector<16x64xf32>
    %132 = arith.mulf %125, %131 : vector<16x64xf32>
    %133 = arith.mulf %132, %126 : vector<16x64xf32>
    %c0_41 = arith.constant 0 : index
    %c0_42 = arith.constant 0 : index
    %134 = vector.load %arg6[%c0_41, %c0_42] : memref<64x64xf32, #tpu.memory_space<vmem>>, vector<64x64xf32>
    %cst_43 = arith.constant dense<0.000000e+00> : vector<16x64xf32>
    %135 = tpu.matmul %133, %134, %cst_43 {dimension_numbers = #tpu.dot_dimension_numbers<[1], [0], [0], [1], [0, 0, 1, 1], [], []>} : vector<16x64xf32>, vector<64x64xf32>, vector<16x64xf32> -> vector<16x64xf32>
    %c0_44 = arith.constant 0 : index
    %c0_45 = arith.constant 0 : index
    %136 = vector.load %arg8[%c0_44, %c0_45] : memref<16x64xf32, #tpu.memory_space<vmem>>, vector<16x64xf32>
    tpu.vector_store %arg8[%c0_44, %c0_45], %135 {strides = array<i32>} : memref<16x64xf32, #tpu.memory_space<vmem>>, vector<16x64xf32>,
    return
  }
  func.func @transform_0(%arg0: i32) -> (i32, i32) {
    %c0_i32 = arith.constant 0 : i32
    %c0_i32_0 = arith.constant 0 : i32
    %c0_i32_1 = arith.constant 0 : i32
    return %c0_i32, %c0_i32_0 : i32, i32
  }
  func.func @transform_1(%arg0: i32) -> (i32, i32) {
    %c0_i32 = arith.constant 0 : i32
    %c0_i32_0 = arith.constant 0 : i32
    %c0_i32_1 = arith.constant 0 : i32
    return %c0_i32, %c0_i32_0 : i32, i32
  }
  func.func @transform_2(%arg0: i32) -> (i32, i32) {
    %c0_i32 = arith.constant 0 : i32
    %c0_i32_0 = arith.constant 0 : i32
    %c0_i32_1 = arith.constant 0 : i32
    return %c0_i32, %c0_i32_0 : i32, i32
  }
  func.func @transform_3(%arg0: i32) -> (i32, i32) {
    %c0_i32 = arith.constant 0 : i32
    %c0_i32_0 = arith.constant 0 : i32
    %c0_i32_1 = arith.constant 0 : i32
    return %c0_i32, %c0_i32_0 : i32, i32
  }
  func.func @transform_4(%arg0: i32) -> (i32, i32) {
    %c0_i32 = arith.constant 0 : i32
    %c0_i32_0 = arith.constant 0 : i32
    %c0_i32_1 = arith.constant 0 : i32
    return %c0_i32, %c0_i32_0 : i32, i32
  }
  func.func @transform_5(%arg0: i32) -> (i32, i32) {
    %c0_i32 = arith.constant 0 : i32
    %c0_i32_0 = arith.constant 0 : i32
    %c0_i32_1 = arith.constant 0 : i32
    return %c0_i32, %c0_i32_0 : i32, i32
  }
  func.func @transform_6(%arg0: i32) -> (i32, i32, i32) {
    %c0_i32 = arith.constant 0 : i32
    %c0_i32_0 = arith.constant 0 : i32
    %c0_i32_1 = arith.constant 0 : i32
    %c0_i32_2 = arith.constant 0 : i32
    return %c0_i32, %c0_i32_0, %c0_i32_1 : i32, i32, i32
  }
  func.func @transform_7(%arg0: i32) -> (i32, i32) {
    %c0_i32 = arith.constant 0 : i32
    %c0_i32_0 = arith.constant 0 : i32
    %c0_i32_1 = arith.constant 0 : i32
    return %c0_i32, %c0_i32_0 : i32, i32
  }
}

</mosaic_0001>

<llo_original>
// kernel: encoder_block.1
$region0: #{encoder_block.1}
  #allocation0 [shape = 'u32[]', space=smem, size = 0x4, offset = 0x4, fixed_abs, tag = 'smem constant byte address 0x4 - core index']
  #allocation1 [shape = 'u32[144,128]{1,0:T(1,128)}', space=vmem, size = 0x12000, scoped, tag = 'internal scratch']
  %s0 = inlined_call_operand.hbm [shape: f32[16,64], index: 0, kind: input, shape index: {}]
  %s1 = inlined_call_operand.vmem [shape: f32[2,64], index: 1, kind: input, shape index: {}]
  %s2 = inlined_call_operand.hbm [shape: f32[64,128], index: 2, kind: input, shape index: {}]
  %s3 = inlined_call_operand.hbm [shape: f32[64,64], index: 3, kind: input, shape index: {}]
  %s4 = inlined_call_operand.hbm [shape: f32[64,128], index: 4, kind: input, shape index: {}]
  %s5 = inlined_call_operand.hbm [shape: f32[64,64], index: 5, kind: input, shape index: {}]
  %s6 = inlined_call_operand.hbm [shape: f32[3,16,128], index: 6, kind: input, shape index: {}]
  %s7 = inlined_call_operand.hbm [shape: f32[16,64], index: 7, kind: output, shape index: {}]
  %s8 = sld [smem:[#allocation0]]
  $region62: #{encoder_block.1} parent=0
    _
  %s10 = ssub.s32 1, %s8
  %s11 = scalar_select 0, %s10, %s8
  $region1: #{encoder_block.1} parent=0
    #allocation2 [shape = 'u8[8192]{0}', space=vmem, size = 0x2000, scoped, tag = 'input window, operand 0, single buffered']
    #allocation3 [shape = 's32[1]{0}', space=sflag, size = 0x4, scoped, tag = 'scoped memory for encoder_block.1']
    #allocation4 [shape = 's32[1]{0}', space=sflag, size = 0x4, scoped, tag = 'scoped memory for encoder_block.1']
    #allocation5 [shape = 'u8[32768]{0}', space=vmem, size = 0x8000, scoped, tag = 'input window, operand 2, single buffered']
    #allocation6 [shape = 's32[1]{0}', space=sflag, size = 0x4, scoped, tag = 'scoped memory for encoder_block.1']
    #allocation7 [shape = 'u8[32768]{0}', space=vmem, size = 0x8000, scoped, tag = 'input window, operand 3, single buffered']
    #allocation8 [shape = 'u8[32768]{0}', space=vmem, size = 0x8000, scoped, tag = 'input window, operand 4, single buffered']
    #allocation9 [shape = 's32[1]{0}', space=sflag, size = 0x4, scoped, tag = 'scoped memory for encoder_block.1']
    #allocation10 [shape = 'u8[32768]{0}', space=vmem, size = 0x8000, scoped, tag = 'input window, operand 5, single buffered']
    #allocation11 [shape = 'u8[24576]{0}', space=vmem, size = 0x6000, scoped, tag = 'input window, operand 6, single buffered']
    #allocation12 [shape = 's32[1]{0}', space=sflag, size = 0x4, scoped, tag = 'scoped memory for encoder_block.1']
    #allocation13 [shape = 'u8[8192]{0}', space=vmem, size = 0x2000, scoped, tag = 'output window, operand 0, single buffered']
    %12 = vsyncpa [#allocation3], 0
    %13 = vsyncpa [#allocation6], 0
    %14 = vsyncpa [#allocation9], 0
    %15 = vsyncpa [#allocation12], 0
    %16 = vsyncpa [#allocation4], 0
    // Predicated region
    $region2: #{encoder_block.1} parent=1 // pred_check
      _
    $region3: #{encoder_block.1} parent=1 // pred_check_branch
      %18 = sbr.rel (0) target = $region5
    $region4: #{encoder_block.1} parent=1 // pred_region
      %s20 = ssub.s32 256, 256
      %21 = vsyncadd [#allocation3], %s20
      %s22 = sshll.u32 [#allocation2], 4
      %s23 = int_to_ptr.vmem [resolvable:$true] %s22
      %28 = dma.hbm_to_vmem [thread:$0]  %s0, 256, %s23, [#allocation3], 128, 128, 8
    $region5: #{encoder_block.1} parent=1 // pred_fallthru
      _
    // Predicated region
    $region6: #{encoder_block.1} parent=1 // pred_check
      _
    $region7: #{encoder_block.1} parent=1 // pred_check_branch
      %30 = sbr.rel (0) target = $region9
    $region8: #{encoder_block.1} parent=1 // pred_region
      _
    $region9: #{encoder_block.1} parent=1 // pred_fallthru
      _
    // Predicated region
    $region10: #{encoder_block.1} parent=1 // pred_check
      _
    $region11: #{encoder_block.1} parent=1 // pred_check_branch
      %32 = sbr.rel (0) target = $region13
    $region12: #{encoder_block.1} parent=1 // pred_region
      %s34 = ssub.s32 1024, 1024
      %35 = vsyncadd [#allocation6], %s34
      %s36 = sshll.u32 [#allocation5], 4
      %s37 = int_to_ptr.vmem [resolvable:$true] %s36
      %42 = dma.hbm_to_vmem [thread:$0]  %s2, 1024, %s37, [#allocation6], 128, 128, 8
    $region13: #{encoder_block.1} parent=1 // pred_fallthru
      _
    // Predicated region
    $region14: #{encoder_block.1} parent=1 // pred_check
      _
    $region15: #{encoder_block.1} parent=1 // pred_check_branch
      %44 = sbr.rel (0) target = $region17
    $region16: #{encoder_block.1} parent=1 // pred_region
      %s46 = ssub.s32 1024, 1024
      %47 = vsyncadd [#allocation6], %s46
      %s48 = sshll.u32 [#allocation7], 4
      %s49 = int_to_ptr.vmem [resolvable:$true] %s48
      %54 = dma.hbm_to_vmem [thread:$0]  %s3, 1024, %s49, [#allocation6], 128, 128, 8
    $region17: #{encoder_block.1} parent=1 // pred_fallthru
      _
    // Predicated region
    $region18: #{encoder_block.1} parent=1 // pred_check
      _
    $region19: #{encoder_block.1} parent=1 // pred_check_branch
      %56 = sbr.rel (0) target = $region21
    $region20: #{encoder_block.1} parent=1 // pred_region
      %s58 = ssub.s32 1024, 1024
      %59 = vsyncadd [#allocation9], %s58
      %s60 = sshll.u32 [#allocation8], 4
      %s61 = int_to_ptr.vmem [resolvable:$true] %s60
      %66 = dma.hbm_to_vmem [thread:$0]  %s4, 1024, %s61, [#allocation9], 128, 128, 8
    $region21: #{encoder_block.1} parent=1 // pred_fallthru
      _
    // Predicated region
    $region22: #{encoder_block.1} parent=1 // pred_check
      _
    $region23: #{encoder_block.1} parent=1 // pred_check_branch
      %68 = sbr.rel (0) target = $region25
    $region24: #{encoder_block.1} parent=1 // pred_region
      %s70 = ssub.s32 1024, 1024
      %71 = vsyncadd [#allocation9], %s70
      %s72 = sshll.u32 [#allocation10], 4
      %s73 = int_to_ptr.vmem [resolvable:$true] %s72
      %78 = dma.hbm_to_vmem [thread:$0]  %s5, 1024, %s73, [#allocation9], 128, 128, 8
    $region25: #{encoder_block.1} parent=1 // pred_fallthru
      _
    // Predicated region
    $region26: #{encoder_block.1} parent=1 // pred_check
      _
    $region27: #{encoder_block.1} parent=1 // pred_check_branch
      %80 = sbr.rel (0) target = $region29
    $region28: #{encoder_block.1} parent=1 // pred_region
      %s82 = ssub.s32 768, 768
      %83 = vsyncadd [#allocation12], %s82
      %s84 = sshll.u32 [#allocation11], 4
      %s85 = int_to_ptr.vmem [resolvable:$true] %s84
      %90 = dma.hbm_to_vmem [thread:$0]  %s6, 768, %s85, [#allocation12], 128, 128, 8
    $region29: #{encoder_block.1} parent=1 // pred_fallthru
      _
    // Predicated region
    $region30: #{encoder_block.1} parent=1 // pred_check
      _
    $region31: #{encoder_block.1} parent=1 // pred_check_branch
      %92 = sbr.rel (0) target = $region33
    $region32: #{encoder_block.1} parent=1 // pred_region
      %93 = dma.done [#allocation3], 256
    $region33: #{encoder_block.1} parent=1 // pred_fallthru
      _
    // Predicated region
    $region34: #{encoder_block.1} parent=1 // pred_check
      _
    $region35: #{encoder_block.1} parent=1 // pred_check_branch
      %95 = sbr.rel (0) target = $region37
    $region36: #{encoder_block.1} parent=1 // pred_region
      %96 = dma.done [#allocation6], 1024
    $region37: #{encoder_block.1} parent=1 // pred_fallthru
      _
    // Predicated region
    $region38: #{encoder_block.1} parent=1 // pred_check
      _
    $region39: #{encoder_block.1} parent=1 // pred_check_branch
      %98 = sbr.rel (0) target = $region41
    $region40: #{encoder_block.1} parent=1 // pred_region
      %99 = dma.done [#allocation6], 1024
    $region41: #{encoder_block.1} parent=1 // pred_fallthru
      _
    // Predicated region
    $region42: #{encoder_block.1} parent=1 // pred_check
      _
    $region43: #{encoder_block.1} parent=1 // pred_check_branch
      %101 = sbr.rel (0) target = $region45
    $region44: #{encoder_block.1} parent=1 // pred_region
      %102 = dma.done [#allocation9], 1024
    $region45: #{encoder_block.1} parent=1 // pred_fallthru
      _
    // Predicated region
    $region46: #{encoder_block.1} parent=1 // pred_check
      _
    $region47: #{encoder_block.1} parent=1 // pred_check_branch
      %104 = sbr.rel (0) target = $region49
    $region48: #{encoder_block.1} parent=1 // pred_region
      %105 = dma.done [#allocation9], 1024
    $region49: #{encoder_block.1} parent=1 // pred_fallthru
      _
    // Predicated region
    $region50: #{encoder_block.1} parent=1 // pred_check
      _
    $region51: #{encoder_block.1} parent=1 // pred_check_branch
      %107 = sbr.rel (0) target = $region53
    $region52: #{encoder_block.1} parent=1 // pred_region
      %108 = dma.done [#allocation12], 768
    $region53: #{encoder_block.1} parent=1 // pred_fallthru
      _
    %v109 = vld [vmem:[#allocation2] sm:$0xff]
    %v110 = vld [vmem:[#allocation2 + $0x8] sm:$0xff]
    %v111 = vld [vmem:[%s1] sm:$0x3]
    %v112 = vmul.f32 %v109, %v109
    %v113 = vmul.f32 %v110, %v110
    %vm114 = vcmask 523264
    %v115 = vsel %vm114, %v112, 0.0
    %116 = vadd.xlane.f32.xlu0 %v115
    %v117 = vpop.xlane.xlu0 %116
    %v118 = vsel %vm114, %v113, 0.0
    %119 = vadd.xlane.f32.xlu0 %v118
    %v120 = vpop.xlane.xlu0 %119
    %v121 = vrcp.pop 64.0
    %v122 = vmul.f32 %v117, %v121
    %v123 = vmul.f32 %v120, %v121
    %v124 = vadd.f32 %v122, 1e-05
    %v125 = vadd.f32 %v123, 1e-05
    %v126 = vrsqrt.pop %v124
    %v127 = vrsqrt.pop %v125
    %v128 = vmul.f32 %v109, %v126
    %v129 = vmul.f32 %v110, %v127
    %v130 = vlaneseq
    %v131 = vshrl.u32 %v130, 7
    %v132 = vsub.s32 0, %v131
    %v133 = vrot.slane %v111, %v132
    %v134 = vmul.f32 %v128, %v133
    %v135 = vmul.f32 %v129, %v133
    %v136 = vld [vmem:[#allocation5] sm:$0xff]
    %v137 = vld [vmem:[#allocation5 + $0x8] sm:$0xff]
    %v138 = vld [vmem:[#allocation5 + $0x10] sm:$0xff]
    %v139 = vld [vmem:[#allocation5 + $0x18] sm:$0xff]
    %v140 = vld [vmem:[#allocation5 + $0x20] sm:$0xff]
    %v141 = vld [vmem:[#allocation5 + $0x28] sm:$0xff]
    %v142 = vld [vmem:[#allocation5 + $0x30] sm:$0xff]
    %v143 = vld [vmem:[#allocation5 + $0x38] sm:$0xff]
    %v145 = vsel %vm114, %v134, 0
    %v148 = vsel %vm114, %v135, 0
    %150 = vmatprep.subr.mxu0 0.0
    %151 = vmatpush1.msra.mxu0 %v136
    %152 = vmatprep.subr.mxu0 0.0
    %153 = vmatpush1.msra.mxu0 %v137
    %154 = vmatprep.subr.mxu0 0.0
    %155 = vmatpush1.msra.mxu0 %v138
    %156 = vmatprep.subr.mxu0 0.0
    %157 = vmatpush1.msra.mxu0 %v139
    %158 = vmatprep.subr.mxu0 0.0
    %159 = vmatpush1.msra.mxu0 %v140
    %160 = vmatprep.subr.mxu0 0.0
    %161 = vmatpush1.msra.mxu0 %v141
    %162 = vmatprep.subr.mxu0 0.0
    %163 = vmatpush1.msra.mxu0 %v142
    %164 = vmatprep.subr.mxu0 0.0
    %165 = vmatpush1.msra.mxu0 %v143
    %166 = vmatprep.subr.mxu0 0.0
    %167 = vmatpush1.msra.mxu0 0.0
    %168 = vmatprep.subr.mxu0 0.0
    %169 = vmatpush1.msra.mxu0 0.0
    %170 = vmatprep.subr.mxu0 0.0
    %171 = vmatpush1.msra.mxu0 0.0
    %172 = vmatprep.subr.mxu0 0.0
    %173 = vmatpush1.msra.mxu0 0.0
    %174 = vmatprep.subr.mxu0 0.0
    %175 = vmatpush1.msra.mxu0 0.0
    %176 = vmatprep.subr.mxu0 0.0
    %177 = vmatpush1.msra.mxu0 0.0
    %178 = vmatprep.subr.mxu0 0.0
    %179 = vmatpush1.msra.mxu0 0.0
    %180 = vmatprep.subr.mxu0 0.0
    %181 = vmatpush1.msra.mxu0 0.0
    %182 = vmatprep.subr.mxu0 0.0
    %183 = vmatpush1.msra.mxu0 0.0
    %184 = vmatprep.subr.mxu0 0.0
    %185 = vmatpush1.msra.mxu0 0.0
    %186 = vmatprep.subr.mxu0 0.0
    %187 = vmatpush1.msra.mxu0 0.0
    %188 = vmatprep.subr.mxu0 0.0
    %189 = vmatpush1.msra.mxu0 0.0
    %190 = vmatprep.subr.mxu0 0.0
    %191 = vmatpush1.msra.mxu0 0.0
    %192 = vmatprep.subr.mxu0 0.0
    %193 = vmatpush1.msra.mxu0 0.0
    %194 = vmatprep.subr.mxu0 0.0
    %195 = vmatpush1.msra.mxu0 0.0
    %196 = vmatprep.subr.mxu0 0.0
    %197 = vmatpush1.msra.mxu0 0.0
    %198 = vmatprep.subr.mxu0 0.0
    %199 = vmatpush1.msra.mxu0 0.0
    %200 = vmatprep.subr.mxu0 0.0
    %201 = vmatpush1.msra.mxu0 0.0
    %202 = vmatprep.subr.mxu0 0.0
    %203 = vmatpush1.msra.mxu0 0.0
    %204 = vmatprep.subr.mxu0 0.0
    %205 = vmatpush1.msra.mxu0 0.0
    %206 = vmatprep.subr.mxu0 0.0
    %207 = vmatpush1.msra.mxu0 0.0
    %208 = vmatprep.subr.mxu0 0.0
    %209 = vmatpush1.msra.mxu0 0.0
    %210 = vmatprep.subr.mxu0 0.0
    %211 = vmatpush1.msra.mxu0 0.0
    %212 = vmatprep.subr.mxu0 0.0
    %213 = vmatpush1.msra.mxu0 0.0
    %214 = vmatprep.mubr.f32.mxu0 0.0
    %215 = vmatmul.mubr.f32.gmra.mrb[0].mxu0 %v145
    %v216 = vpop.f32.mrb[0].mxu0
    %v217 = vadd.f32 0.0, %v216
    %v218 = vpop.f32.mrb[0].mxu0
    %219 = vmatprep.mubr.f32.mxu0 0.0
    %220 = vmatmul.mubr.f32.gmra.mrb[0].mxu0 %v148
    %v221 = vpop.f32.mrb[0].mxu0
    %v222 = vadd.f32 0.0, %v221
    %v223 = vpop.f32.mrb[0].mxu0
    %224 = vdwg.mxu0
    %v225 = vld [vmem:[#allocation11] sm:$0xff]
    %v226 = vld [vmem:[#allocation11 + $0x8] sm:$0xff]
    %s227 = scalar_lea.vmem [#allocation11], 16
    %v228 = vld [vmem:[%s227] sm:$0xff]
    %v229 = vld [vmem:[%s227 + $0x8] sm:$0xff]
    %s230 = scalar_lea.vmem [#allocation11], 32
    %v231 = vld [vmem:[%s230] sm:$0xff]
    %v232 = vld [vmem:[%s230 + $0x8] sm:$0xff]
    %v233 = vmul.f32 %v217, %v225
    %v234 = vmul.f32 %v222, %v226
    %235 = vrot.lane.b32.xlu0 %v217, 127
    %v236 = vpop.permute.xlu0 %235
    %237 = vrot.lane.b32.xlu0 %v222, 127
    %v238 = vpop.permute.xlu0 %237
    %v239 = vmul.f32 %v236, %v228
    %v240 = vmul.f32 %v238, %v229
    %v241 = vadd.f32 %v233, %v239
    %v242 = vadd.f32 %v234, %v240
    %243 = vrot.lane.b32.xlu0 %v217, 1
    %v244 = vpop.permute.xlu0 %243
    %245 = vrot.lane.b32.xlu0 %v222, 1
    %v246 = vpop.permute.xlu0 %245
    %v247 = vmul.f32 %v244, %v231
    %v248 = vmul.f32 %v246, %v232
    %v249 = vadd.f32 %v241, %v247
    %v250 = vadd.f32 %v242, %v248
    %252 = vrot.lane.b32.xlu0 %v249, 112
    %v253 = vpop.permute.xlu0 %252
    %254 = vrot.lane.b32.xlu0 %v249, 64
    %v255 = vpop.permute.xlu0 %254
    %vm256 = vcmask 130048
    %v257 = vsel %vm256, %v249, 0
    %v259 = vsel %vm256, %v253, 0
    %v261 = vsel %vm256, %v255, 0
    %263 = vmatprep.subr.mxu0 0.0
    %264 = vmatpush1.xpose.msra.mxu0 %v261
    %265 = vmatprep.subr.mxu0 0.0
    %266 = vmatpush1.xpose.msra.mxu0 0.0
    %267 = vmatprep.subr.mxu0 0.0
    %268 = vmatpush1.xpose.msra.mxu0 0.0
    %269 = vmatprep.subr.mxu0 0.0
    %270 = vmatpush1.xpose.msra.mxu0 0.0
    %271 = vmatprep.subr.mxu0 0.0
    %272 = vmatpush1.xpose.msra.mxu0 0.0
    %273 = vmatprep.subr.mxu0 0.0
    %274 = vmatpush1.xpose.msra.mxu0 0.0
    %275 = vmatprep.subr.mxu0 0.0
    %276 = vmatpush1.xpose.msra.mxu0 0.0
    %277 = vmatprep.subr.mxu0 0.0
    %278 = vmatpush1.xpose.msra.mxu0 0.0
    %279 = vmatprep.subr.mxu0 0.0
    %280 = vmatpush1.xpose.msra.mxu0 0.0
    %281 = vmatprep.subr.mxu0 0.0
    %282 = vmatpush1.xpose.msra.mxu0 0.0
    %283 = vmatprep.subr.mxu0 0.0
    %284 = vmatpush1.xpose.msra.mxu0 0.0
    %285 = vmatprep.subr.mxu0 0.0
    %286 = vmatpush1.xpose.msra.mxu0 0.0
    %287 = vmatprep.subr.mxu0 0.0
    %288 = vmatpush1.xpose.msra.mxu0 0.0
    %289 = vmatprep.subr.mxu0 0.0
    %290 = vmatpush1.xpose.msra.mxu0 0.0
    %291 = vmatprep.subr.mxu0 0.0
    %292 = vmatpush1.xpose.msra.mxu0 0.0
    %293 = vmatprep.subr.mxu0 0.0
    %294 = vmatpush1.xpose.msra.mxu0 0.0
    %295 = vmatprep.subr.mxu0 0.0
    %296 = vmatpush1.xpose.msra.mxu0 0.0
    %297 = vmatprep.subr.mxu0 0.0
    %298 = vmatpush1.xpose.msra.mxu0 0.0
    %299 = vmatprep.subr.mxu0 0.0
    %300 = vmatpush1.xpose.msra.mxu0 0.0
    %301 = vmatprep.subr.mxu0 0.0
    %302 = vmatpush1.xpose.msra.mxu0 0.0
    %303 = vmatprep.subr.mxu0 0.0
    %304 = vmatpush1.xpose.msra.mxu0 0.0
    %305 = vmatprep.subr.mxu0 0.0
    %306 = vmatpush1.xpose.msra.mxu0 0.0
    %307 = vmatprep.subr.mxu0 0.0
    %308 = vmatpush1.xpose.msra.mxu0 0.0
    %309 = vmatprep.subr.mxu0 0.0
    %310 = vmatpush1.xpose.msra.mxu0 0.0
    %311 = vmatprep.subr.mxu0 0.0
    %312 = vmatpush1.xpose.msra.mxu0 0.0
    %313 = vmatprep.subr.mxu0 0.0
    %314 = vmatpush1.xpose.msra.mxu0 0.0
    %315 = vmatprep.subr.mxu0 0.0
    %316 = vmatpush1.xpose.msra.mxu0 0.0
    %317 = vmatprep.subr.mxu0 0.0
    %318 = vmatpush1.xpose.msra.mxu0 0.0
    %319 = vmatprep.subr.mxu0 0.0
    %320 = vmatpush1.xpose.msra.mxu0 0.0
    %321 = vmatprep.subr.mxu0 0.0
    %322 = vmatpush1.xpose.msra.mxu0 0.0
    %323 = vmatprep.subr.mxu0 0.0
    %324 = vmatpush1.xpose.msra.mxu0 0.0
    %325 = vmatprep.subr.mxu0 0.0
    %326 = vmatpush1.xpose.msra.mxu0 0.0
    %327 = vmatprep.mubr.f32.mxu0 0.0
    %328 = vmatmul.mubr.f32.gmra.mrb[0].mxu0 %v257
    %v329 = vpop.f32.mrb[0].mxu0
    %v330 = vadd.f32 0.0, %v329
    %v331 = vpop.f32.mrb[0].mxu0
    %332 = vmatprep.mubr.f32.mxu0 0.0
    %333 = vmatmul.mubr.f32.gmra.mrb[0].mxu0 %v259
    %v334 = vpop.f32.mrb[0].mxu0
    %v335 = vadd.f32 0.0, %v334
    %v336 = vpop.f32.mrb[0].mxu0
    %337 = vdwg.mxu0
    %vm338 = vcmask 64512
    %v339 = vsel %vm338, %v330, -inf
    %340 = vmax.xlane.f32.xlu0 %v339
    %v341 = vpop.xlane.xlu0 %340
    %v342 = vsel %vm338, %v335, -inf
    %343 = vmax.xlane.f32.xlu0 %v342
    %v344 = vpop.xlane.xlu0 %343
    %v345 = vsub.f32 %v330, %v341
    %v346 = vsub.f32 %v335, %v344
    %v347 = vmul.f32 %v345, 1.442695
    %v348 = vpow.pop %v347
    %v349 = vmul.f32 %v346, 1.442695
    %v350 = vpow.pop %v349
    %v351 = vsel %vm338, %v348, 0.0
    %352 = vadd.xlane.f32.xlu0 %v351
    %v353 = vpop.xlane.xlu0 %352
    %v354 = vsel %vm338, %v350, 0.0
    %355 = vadd.xlane.f32.xlu0 %v354
    %v356 = vpop.xlane.xlu0 %355
    %v357 = vrcp.pop %v353
    %v358 = vmul.f32 %v348, %v357
    %v359 = vrcp.pop %v356
    %v360 = vmul.f32 %v350, %v359
    %361 = vrot.lane.b32.xlu0 %v249, 32
    %v362 = vpop.permute.xlu0 %361
    %v365 = vsel %vm338, %v358, 0
    %v368 = vsel %vm338, %v360, 0
    %370 = vmatprep.subr.mxu0 0.0
    %371 = vmatpush1.msra.mxu0 %v362
    %372 = vmatprep.subr.mxu0 0.0
    %373 = vmatpush1.msra.mxu0 0.0
    %374 = vmatprep.subr.mxu0 0.0
    %375 = vmatpush1.msra.mxu0 0.0
    %376 = vmatprep.subr.mxu0 0.0
    %377 = vmatpush1.msra.mxu0 0.0
    %378 = vmatprep.subr.mxu0 0.0
    %379 = vmatpush1.msra.mxu0 0.0
    %380 = vmatprep.subr.mxu0 0.0
    %381 = vmatpush1.msra.mxu0 0.0
    %382 = vmatprep.subr.mxu0 0.0
    %383 = vmatpush1.msra.mxu0 0.0
    %384 = vmatprep.subr.mxu0 0.0
    %385 = vmatpush1.msra.mxu0 0.0
    %386 = vmatprep.subr.mxu0 0.0
    %387 = vmatpush1.msra.mxu0 0.0
    %388 = vmatprep.subr.mxu0 0.0
    %389 = vmatpush1.msra.mxu0 0.0
    %390 = vmatprep.subr.mxu0 0.0
    %391 = vmatpush1.msra.mxu0 0.0
    %392 = vmatprep.subr.mxu0 0.0
    %393 = vmatpush1.msra.mxu0 0.0
    %394 = vmatprep.subr.mxu0 0.0
    %395 = vmatpush1.msra.mxu0 0.0
    %396 = vmatprep.subr.mxu0 0.0
    %397 = vmatpush1.msra.mxu0 0.0
    %398 = vmatprep.subr.mxu0 0.0
    %399 = vmatpush1.msra.mxu0 0.0
    %400 = vmatprep.subr.mxu0 0.0
    %401 = vmatpush1.msra.mxu0 0.0
    %402 = vmatprep.subr.mxu0 0.0
    %403 = vmatpush1.msra.mxu0 0.0
    %404 = vmatprep.subr.mxu0 0.0
    %405 = vmatpush1.msra.mxu0 0.0
    %406 = vmatprep.subr.mxu0 0.0
    %407 = vmatpush1.msra.mxu0 0.0
    %408 = vmatprep.subr.mxu0 0.0
    %409 = vmatpush1.msra.mxu0 0.0
    %410 = vmatprep.subr.mxu0 0.0
    %411 = vmatpush1.msra.mxu0 0.0
    %412 = vmatprep.subr.mxu0 0.0
    %413 = vmatpush1.msra.mxu0 0.0
    %414 = vmatprep.subr.mxu0 0.0
    %415 = vmatpush1.msra.mxu0 0.0
    %416 = vmatprep.subr.mxu0 0.0
    %417 = vmatpush1.msra.mxu0 0.0
    %418 = vmatprep.subr.mxu0 0.0
    %419 = vmatpush1.msra.mxu0 0.0
    %420 = vmatprep.subr.mxu0 0.0
    %421 = vmatpush1.msra.mxu0 0.0
    %422 = vmatprep.subr.mxu0 0.0
    %423 = vmatpush1.msra.mxu0 0.0
    %424 = vmatprep.subr.mxu0 0.0
    %425 = vmatpush1.msra.mxu0 0.0
    %426 = vmatprep.subr.mxu0 0.0
    %427 = vmatpush1.msra.mxu0 0.0
    %428 = vmatprep.subr.mxu0 0.0
    %429 = vmatpush1.msra.mxu0 0.0
    %430 = vmatprep.subr.mxu0 0.0
    %431 = vmatpush1.msra.mxu0 0.0
    %432 = vmatprep.subr.mxu0 0.0
    %433 = vmatpush1.msra.mxu0 0.0
    %434 = vmatprep.mubr.f32.mxu0 0.0
    %435 = vmatmul.mubr.f32.gmra.mrb[0].mxu0 %v365
    %v436 = vpop.f32.mrb[0].mxu0
    %v437 = vadd.f32 0.0, %v436
    %v438 = vpop.f32.mrb[0].mxu0
    %439 = vmatprep.mubr.f32.mxu0 0.0
    %440 = vmatmul.mubr.f32.gmra.mrb[0].mxu0 %v368
    %v441 = vpop.f32.mrb[0].mxu0
    %v442 = vadd.f32 0.0, %v441
    %v443 = vpop.f32.mrb[0].mxu0
    %444 = vdwg.mxu0
    %445 = vrot.lane.b32.xlu0 %v249, 96
    %v446 = vpop.permute.xlu0 %445
    %447 = vrot.lane.b32.xlu0 %v253, 96
    %v448 = vpop.permute.xlu0 %447
    %449 = vrot.lane.b32.xlu0 %v249, 48
    %v450 = vpop.permute.xlu0 %449
    %v451 = vsel %vm256, %v446, 0
    %v453 = vsel %vm256, %v448, 0
    %v455 = vsel %vm256, %v450, 0
    %457 = vmatprep.subr.mxu0 0.0
    %458 = vmatpush1.xpose.msra.mxu0 %v455
    %459 = vmatprep.subr.mxu0 0.0
    %460 = vmatpush1.xpose.msra.mxu0 0.0
    %461 = vmatprep.subr.mxu0 0.0
    %462 = vmatpush1.xpose.msra.mxu0 0.0
    %463 = vmatprep.subr.mxu0 0.0
    %464 = vmatpush1.xpose.msra.mxu0 0.0
    %465 = vmatprep.subr.mxu0 0.0
    %466 = vmatpush1.xpose.msra.mxu0 0.0
    %467 = vmatprep.subr.mxu0 0.0
    %468 = vmatpush1.xpose.msra.mxu0 0.0
    %469 = vmatprep.subr.mxu0 0.0
    %470 = vmatpush1.xpose.msra.mxu0 0.0
    %471 = vmatprep.subr.mxu0 0.0
    %472 = vmatpush1.xpose.msra.mxu0 0.0
    %473 = vmatprep.subr.mxu0 0.0
    %474 = vmatpush1.xpose.msra.mxu0 0.0
    %475 = vmatprep.subr.mxu0 0.0
    %476 = vmatpush1.xpose.msra.mxu0 0.0
    %477 = vmatprep.subr.mxu0 0.0
    %478 = vmatpush1.xpose.msra.mxu0 0.0
    %479 = vmatprep.subr.mxu0 0.0
    %480 = vmatpush1.xpose.msra.mxu0 0.0
    %481 = vmatprep.subr.mxu0 0.0
    %482 = vmatpush1.xpose.msra.mxu0 0.0
    %483 = vmatprep.subr.mxu0 0.0
    %484 = vmatpush1.xpose.msra.mxu0 0.0
    %485 = vmatprep.subr.mxu0 0.0
    %486 = vmatpush1.xpose.msra.mxu0 0.0
    %487 = vmatprep.subr.mxu0 0.0
    %488 = vmatpush1.xpose.msra.mxu0 0.0
    %489 = vmatprep.subr.mxu0 0.0
    %490 = vmatpush1.xpose.msra.mxu0 0.0
    %491 = vmatprep.subr.mxu0 0.0
    %492 = vmatpush1.xpose.msra.mxu0 0.0
    %493 = vmatprep.subr.mxu0 0.0
    %494 = vmatpush1.xpose.msra.mxu0 0.0
    %495 = vmatprep.subr.mxu0 0.0
    %496 = vmatpush1.xpose.msra.mxu0 0.0
    %497 = vmatprep.subr.mxu0 0.0
    %498 = vmatpush1.xpose.msra.mxu0 0.0
    %499 = vmatprep.subr.mxu0 0.0
    %500 = vmatpush1.xpose.msra.mxu0 0.0
    %501 = vmatprep.subr.mxu0 0.0
    %502 = vmatpush1.xpose.msra.mxu0 0.0
    %503 = vmatprep.subr.mxu0 0.0
    %504 = vmatpush1.xpose.msra.mxu0 0.0
    %505 = vmatprep.subr.mxu0 0.0
    %506 = vmatpush1.xpose.msra.mxu0 0.0
    %507 = vmatprep.subr.mxu0 0.0
    %508 = vmatpush1.xpose.msra.mxu0 0.0
    %509 = vmatprep.subr.mxu0 0.0
    %510 = vmatpush1.xpose.msra.mxu0 0.0
    %511 = vmatprep.subr.mxu0 0.0
    %512 = vmatpush1.xpose.msra.mxu0 0.0
    %513 = vmatprep.subr.mxu0 0.0
    %514 = vmatpush1.xpose.msra.mxu0 0.0
    %515 = vmatprep.subr.mxu0 0.0
    %516 = vmatpush1.xpose.msra.mxu0 0.0
    %517 = vmatprep.subr.mxu0 0.0
    %518 = vmatpush1.xpose.msra.mxu0 0.0
    %519 = vmatprep.subr.mxu0 0.0
    %520 = vmatpush1.xpose.msra.mxu0 0.0
    %521 = vmatprep.mubr.f32.mxu0 0.0
    %522 = vmatmul.mubr.f32.gmra.mrb[0].mxu0 %v451
    %v523 = vpop.f32.mrb[0].mxu0
    %v524 = vadd.f32 0.0, %v523
    %v525 = vpop.f32.mrb[0].mxu0
    %526 = vmatprep.mubr.f32.mxu0 0.0
    %527 = vmatmul.mubr.f32.gmra.mrb[0].mxu0 %v453
    %v528 = vpop.f32.mrb[0].mxu0
    %v529 = vadd.f32 0.0, %v528
    %v530 = vpop.f32.mrb[0].mxu0
    %531 = vdwg.mxu0
    %v532 = vsel %vm338, %v524, -inf
    %533 = vmax.xlane.f32.xlu0 %v532
    %v534 = vpop.xlane.xlu0 %533
    %v535 = vsel %vm338, %v529, -inf
    %536 = vmax.xlane.f32.xlu0 %v535
    %v537 = vpop.xlane.xlu0 %536
    %v538 = vsub.f32 %v524, %v534
    %v539 = vsub.f32 %v529, %v537
    %v540 = vmul.f32 %v538, 1.442695
    %v541 = vpow.pop %v540
    %v542 = vmul.f32 %v539, 1.442695
    %v543 = vpow.pop %v542
    %v544 = vsel %vm338, %v541, 0.0
    %545 = vadd.xlane.f32.xlu0 %v544
    %v546 = vpop.xlane.xlu0 %545
    %v547 = vsel %vm338, %v543, 0.0
    %548 = vadd.xlane.f32.xlu0 %v547
    %v549 = vpop.xlane.xlu0 %548
    %v550 = vrcp.pop %v546
    %v551 = vmul.f32 %v541, %v550
    %v552 = vrcp.pop %v549
    %v553 = vmul.f32 %v543, %v552
    %554 = vrot.lane.b32.xlu0 %v249, 16
    %v555 = vpop.permute.xlu0 %554
    %v558 = vsel %vm338, %v551, 0
    %v561 = vsel %vm338, %v553, 0
    %563 = vmatprep.subr.mxu0 0.0
    %564 = vmatpush1.msra.mxu0 %v555
    %565 = vmatprep.subr.mxu0 0.0
    %566 = vmatpush1.msra.mxu0 0.0
    %567 = vmatprep.subr.mxu0 0.0
    %568 = vmatpush1.msra.mxu0 0.0
    %569 = vmatprep.subr.mxu0 0.0
    %570 = vmatpush1.msra.mxu0 0.0
    %571 = vmatprep.subr.mxu0 0.0
    %572 = vmatpush1.msra.mxu0 0.0
    %573 = vmatprep.subr.mxu0 0.0
    %574 = vmatpush1.msra.mxu0 0.0
    %575 = vmatprep.subr.mxu0 0.0
    %576 = vmatpush1.msra.mxu0 0.0
    %577 = vmatprep.subr.mxu0 0.0
    %578 = vmatpush1.msra.mxu0 0.0
    %579 = vmatprep.subr.mxu0 0.0
    %580 = vmatpush1.msra.mxu0 0.0
    %581 = vmatprep.subr.mxu0 0.0
    %582 = vmatpush1.msra.mxu0 0.0
    %583 = vmatprep.subr.mxu0 0.0
    %584 = vmatpush1.msra.mxu0 0.0
    %585 = vmatprep.subr.mxu0 0.0
    %586 = vmatpush1.msra.mxu0 0.0
    %587 = vmatprep.subr.mxu0 0.0
    %588 = vmatpush1.msra.mxu0 0.0
    %589 = vmatprep.subr.mxu0 0.0
    %590 = vmatpush1.msra.mxu0 0.0
    %591 = vmatprep.subr.mxu0 0.0
    %592 = vmatpush1.msra.mxu0 0.0
    %593 = vmatprep.subr.mxu0 0.0
    %594 = vmatpush1.msra.mxu0 0.0
    %595 = vmatprep.subr.mxu0 0.0
    %596 = vmatpush1.msra.mxu0 0.0
    %597 = vmatprep.subr.mxu0 0.0
    %598 = vmatpush1.msra.mxu0 0.0
    %599 = vmatprep.subr.mxu0 0.0
    %600 = vmatpush1.msra.mxu0 0.0
    %601 = vmatprep.subr.mxu0 0.0
    %602 = vmatpush1.msra.mxu0 0.0
    %603 = vmatprep.subr.mxu0 0.0
    %604 = vmatpush1.msra.mxu0 0.0
    %605 = vmatprep.subr.mxu0 0.0
    %606 = vmatpush1.msra.mxu0 0.0
    %607 = vmatprep.subr.mxu0 0.0
    %608 = vmatpush1.msra.mxu0 0.0
    %609 = vmatprep.subr.mxu0 0.0
    %610 = vmatpush1.msra.mxu0 0.0
    %611 = vmatprep.subr.mxu0 0.0
    %612 = vmatpush1.msra.mxu0 0.0
    %613 = vmatprep.subr.mxu0 0.0
    %614 = vmatpush1.msra.mxu0 0.0
    %615 = vmatprep.subr.mxu0 0.0
    %616 = vmatpush1.msra.mxu0 0.0
    %617 = vmatprep.subr.mxu0 0.0
    %618 = vmatpush1.msra.mxu0 0.0
    %619 = vmatprep.subr.mxu0 0.0
    %620 = vmatpush1.msra.mxu0 0.0
    %621 = vmatprep.subr.mxu0 0.0
    %622 = vmatpush1.msra.mxu0 0.0
    %623 = vmatprep.subr.mxu0 0.0
    %624 = vmatpush1.msra.mxu0 0.0
    %625 = vmatprep.subr.mxu0 0.0
    %626 = vmatpush1.msra.mxu0 0.0
    %627 = vmatprep.mubr.f32.mxu0 0.0
    %628 = vmatmul.mubr.f32.gmra.mrb[0].mxu0 %v558
    %v629 = vpop.f32.mrb[0].mxu0
    %v630 = vadd.f32 0.0, %v629
    %v631 = vpop.f32.mrb[0].mxu0
    %632 = vmatprep.mubr.f32.mxu0 0.0
    %633 = vmatmul.mubr.f32.gmra.mrb[0].mxu0 %v561
    %v634 = vpop.f32.mrb[0].mxu0
    %v635 = vadd.f32 0.0, %v634
    %v636 = vpop.f32.mrb[0].mxu0
    %637 = vdwg.mxu0
    %639 = vrot.lane.b32.xlu0 %v442, 16
    %v640 = vpop.permute.xlu0 %639
    %643 = vrot.lane.b32.xlu0 %v630, 32
    %v644 = vpop.permute.xlu0 %643
    %647 = vrot.lane.b32.xlu0 %v635, 48
    %v648 = vpop.permute.xlu0 %647
    %v650 = vsel %vm256, %v437, %v640
    %vm651 = vcmask 261120
    %v652 = vsel %vm651, %v650, %v644
    %vm653 = vcmask 392192
    %v654 = vsel %vm653, %v652, %v648
    %656 = vrot.lane.b32.xlu0 %v250, 112
    %v657 = vpop.permute.xlu0 %656
    %658 = vrot.lane.b32.xlu0 %v250, 64
    %v659 = vpop.permute.xlu0 %658
    %v660 = vsel %vm256, %v250, 0
    %v662 = vsel %vm256, %v657, 0
    %v664 = vsel %vm256, %v659, 0
    %666 = vmatprep.subr.mxu0 0.0
    %667 = vmatpush1.xpose.msra.mxu0 %v664
    %668 = vmatprep.subr.mxu0 0.0
    %669 = vmatpush1.xpose.msra.mxu0 0.0
    %670 = vmatprep.subr.mxu0 0.0
    %671 = vmatpush1.xpose.msra.mxu0 0.0
    %672 = vmatprep.subr.mxu0 0.0
    %673 = vmatpush1.xpose.msra.mxu0 0.0
    %674 = vmatprep.subr.mxu0 0.0
    %675 = vmatpush1.xpose.msra.mxu0 0.0
    %676 = vmatprep.subr.mxu0 0.0
    %677 = vmatpush1.xpose.msra.mxu0 0.0
    %678 = vmatprep.subr.mxu0 0.0
    %679 = vmatpush1.xpose.msra.mxu0 0.0
    %680 = vmatprep.subr.mxu0 0.0
    %681 = vmatpush1.xpose.msra.mxu0 0.0
    %682 = vmatprep.subr.mxu0 0.0
    %683 = vmatpush1.xpose.msra.mxu0 0.0
    %684 = vmatprep.subr.mxu0 0.0
    %685 = vmatpush1.xpose.msra.mxu0 0.0
    %686 = vmatprep.subr.mxu0 0.0
    %687 = vmatpush1.xpose.msra.mxu0 0.0
    %688 = vmatprep.subr.mxu0 0.0
    %689 = vmatpush1.xpose.msra.mxu0 0.0
    %690 = vmatprep.subr.mxu0 0.0
    %691 = vmatpush1.xpose.msra.mxu0 0.0
    %692 = vmatprep.subr.mxu0 0.0
    %693 = vmatpush1.xpose.msra.mxu0 0.0
    %694 = vmatprep.subr.mxu0 0.0
    %695 = vmatpush1.xpose.msra.mxu0 0.0
    %696 = vmatprep.subr.mxu0 0.0
    %697 = vmatpush1.xpose.msra.mxu0 0.0
    %698 = vmatprep.subr.mxu0 0.0
    %699 = vmatpush1.xpose.msra.mxu0 0.0
    %700 = vmatprep.subr.mxu0 0.0
    %701 = vmatpush1.xpose.msra.mxu0 0.0
    %702 = vmatprep.subr.mxu0 0.0
    %703 = vmatpush1.xpose.msra.mxu0 0.0
    %704 = vmatprep.subr.mxu0 0.0
    %705 = vmatpush1.xpose.msra.mxu0 0.0
    %706 = vmatprep.subr.mxu0 0.0
    %707 = vmatpush1.xpose.msra.mxu0 0.0
    %708 = vmatprep.subr.mxu0 0.0
    %709 = vmatpush1.xpose.msra.mxu0 0.0
    %710 = vmatprep.subr.mxu0 0.0
    %711 = vmatpush1.xpose.msra.mxu0 0.0
    %712 = vmatprep.subr.mxu0 0.0
    %713 = vmatpush1.xpose.msra.mxu0 0.0
    %714 = vmatprep.subr.mxu0 0.0
    %715 = vmatpush1.xpose.msra.mxu0 0.0
    %716 = vmatprep.subr.mxu0 0.0
    %717 = vmatpush1.xpose.msra.mxu0 0.0
    %718 = vmatprep.subr.mxu0 0.0
    %719 = vmatpush1.xpose.msra.mxu0 0.0
    %720 = vmatprep.subr.mxu0 0.0
    %721 = vmatpush1.xpose.msra.mxu0 0.0
    %722 = vmatprep.subr.mxu0 0.0
    %723 = vmatpush1.xpose.msra.mxu0 0.0
    %724 = vmatprep.subr.mxu0 0.0
    %725 = vmatpush1.xpose.msra.mxu0 0.0
    %726 = vmatprep.subr.mxu0 0.0
    %727 = vmatpush1.xpose.msra.mxu0 0.0
    %728 = vmatprep.subr.mxu0 0.0
    %729 = vmatpush1.xpose.msra.mxu0 0.0
    %730 = vmatprep.mubr.f32.mxu0 0.0
    %731 = vmatmul.mubr.f32.gmra.mrb[0].mxu0 %v660
    %v732 = vpop.f32.mrb[0].mxu0
    %v733 = vadd.f32 0.0, %v732
    %v734 = vpop.f32.mrb[0].mxu0
    %735 = vmatprep.mubr.f32.mxu0 0.0
    %736 = vmatmul.mubr.f32.gmra.mrb[0].mxu0 %v662
    %v737 = vpop.f32.mrb[0].mxu0
    %v738 = vadd.f32 0.0, %v737
    %v739 = vpop.f32.mrb[0].mxu0
    %740 = vdwg.mxu0
    %v741 = vsel %vm338, %v733, -inf
    %742 = vmax.xlane.f32.xlu0 %v741
    %v743 = vpop.xlane.xlu0 %742
    %v744 = vsel %vm338, %v738, -inf
    %745 = vmax.xlane.f32.xlu0 %v744
    %v746 = vpop.xlane.xlu0 %745
    %v747 = vsub.f32 %v733, %v743
    %v748 = vsub.f32 %v738, %v746
    %v749 = vmul.f32 %v747, 1.442695
    %v750 = vpow.pop %v749
    %v751 = vmul.f32 %v748, 1.442695
    %v752 = vpow.pop %v751
    %v753 = vsel %vm338, %v750, 0.0
    %754 = vadd.xlane.f32.xlu0 %v753
    %v755 = vpop.xlane.xlu0 %754
    %v756 = vsel %vm338, %v752, 0.0
    %757 = vadd.xlane.f32.xlu0 %v756
    %v758 = vpop.xlane.xlu0 %757
    %v759 = vrcp.pop %v755
    %v760 = vmul.f32 %v750, %v759
    %v761 = vrcp.pop %v758
    %v762 = vmul.f32 %v752, %v761
    %763 = vrot.lane.b32.xlu0 %v250, 32
    %v764 = vpop.permute.xlu0 %763
    %v767 = vsel %vm338, %v760, 0
    %v770 = vsel %vm338, %v762, 0
    %772 = vmatprep.subr.mxu0 0.0
    %773 = vmatpush1.msra.mxu0 %v764
    %774 = vmatprep.subr.mxu0 0.0
    %775 = vmatpush1.msra.mxu0 0.0
    %776 = vmatprep.subr.mxu0 0.0
    %777 = vmatpush1.msra.mxu0 0.0
    %778 = vmatprep.subr.mxu0 0.0
    %779 = vmatpush1.msra.mxu0 0.0
    %780 = vmatprep.subr.mxu0 0.0
    %781 = vmatpush1.msra.mxu0 0.0
    %782 = vmatprep.subr.mxu0 0.0
    %783 = vmatpush1.msra.mxu0 0.0
    %784 = vmatprep.subr.mxu0 0.0
    %785 = vmatpush1.msra.mxu0 0.0
    %786 = vmatprep.subr.mxu0 0.0
    %787 = vmatpush1.msra.mxu0 0.0
    %788 = vmatprep.subr.mxu0 0.0
    %789 = vmatpush1.msra.mxu0 0.0
    %790 = vmatprep.subr.mxu0 0.0
    %791 = vmatpush1.msra.mxu0 0.0
    %792 = vmatprep.subr.mxu0 0.0
    %793 = vmatpush1.msra.mxu0 0.0
    %794 = vmatprep.subr.mxu0 0.0
    %795 = vmatpush1.msra.mxu0 0.0
    %796 = vmatprep.subr.mxu0 0.0
    %797 = vmatpush1.msra.mxu0 0.0
    %798 = vmatprep.subr.mxu0 0.0
    %799 = vmatpush1.msra.mxu0 0.0
    %800 = vmatprep.subr.mxu0 0.0
    %801 = vmatpush1.msra.mxu0 0.0
    %802 = vmatprep.subr.mxu0 0.0
    %803 = vmatpush1.msra.mxu0 0.0
    %804 = vmatprep.subr.mxu0 0.0
    %805 = vmatpush1.msra.mxu0 0.0
    %806 = vmatprep.subr.mxu0 0.0
    %807 = vmatpush1.msra.mxu0 0.0
    %808 = vmatprep.subr.mxu0 0.0
    %809 = vmatpush1.msra.mxu0 0.0
    %810 = vmatprep.subr.mxu0 0.0
    %811 = vmatpush1.msra.mxu0 0.0
    %812 = vmatprep.subr.mxu0 0.0
    %813 = vmatpush1.msra.mxu0 0.0
    %814 = vmatprep.subr.mxu0 0.0
    %815 = vmatpush1.msra.mxu0 0.0
    %816 = vmatprep.subr.mxu0 0.0
    %817 = vmatpush1.msra.mxu0 0.0
    %818 = vmatprep.subr.mxu0 0.0
    %819 = vmatpush1.msra.mxu0 0.0
    %820 = vmatprep.subr.mxu0 0.0
    %821 = vmatpush1.msra.mxu0 0.0
    %822 = vmatprep.subr.mxu0 0.0
    %823 = vmatpush1.msra.mxu0 0.0
    %824 = vmatprep.subr.mxu0 0.0
    %825 = vmatpush1.msra.mxu0 0.0
    %826 = vmatprep.subr.mxu0 0.0
    %827 = vmatpush1.msra.mxu0 0.0
    %828 = vmatprep.subr.mxu0 0.0
    %829 = vmatpush1.msra.mxu0 0.0
    %830 = vmatprep.subr.mxu0 0.0
    %831 = vmatpush1.msra.mxu0 0.0
    %832 = vmatprep.subr.mxu0 0.0
    %833 = vmatpush1.msra.mxu0 0.0
    %834 = vmatprep.subr.mxu0 0.0
    %835 = vmatpush1.msra.mxu0 0.0
    %836 = vmatprep.mubr.f32.mxu0 0.0
    %837 = vmatmul.mubr.f32.gmra.mrb[0].mxu0 %v767
    %v838 = vpop.f32.mrb[0].mxu0
    %v839 = vadd.f32 0.0, %v838
    %v840 = vpop.f32.mrb[0].mxu0
    %841 = vmatprep.mubr.f32.mxu0 0.0
    %842 = vmatmul.mubr.f32.gmra.mrb[0].mxu0 %v770
    %v843 = vpop.f32.mrb[0].mxu0
    %v844 = vadd.f32 0.0, %v843
    %v845 = vpop.f32.mrb[0].mxu0
    %846 = vdwg.mxu0
    %847 = vrot.lane.b32.xlu0 %v250, 96
    %v848 = vpop.permute.xlu0 %847
    %849 = vrot.lane.b32.xlu0 %v657, 96
    %v850 = vpop.permute.xlu0 %849
    %851 = vrot.lane.b32.xlu0 %v250, 48
    %v852 = vpop.permute.xlu0 %851
    %v853 = vsel %vm256, %v848, 0
    %v855 = vsel %vm256, %v850, 0
    %v857 = vsel %vm256, %v852, 0
    %859 = vmatprep.subr.mxu0 0.0
    %860 = vmatpush1.xpose.msra.mxu0 %v857
    %861 = vmatprep.subr.mxu0 0.0
    %862 = vmatpush1.xpose.msra.mxu0 0.0
    %863 = vmatprep.subr.mxu0 0.0
    %864 = vmatpush1.xpose.msra.mxu0 0.0
    %865 = vmatprep.subr.mxu0 0.0
    %866 = vmatpush1.xpose.msra.mxu0 0.0
    %867 = vmatprep.subr.mxu0 0.0
    %868 = vmatpush1.xpose.msra.mxu0 0.0
    %869 = vmatprep.subr.mxu0 0.0
    %870 = vmatpush1.xpose.msra.mxu0 0.0
    %871 = vmatprep.subr.mxu0 0.0
    %872 = vmatpush1.xpose.msra.mxu0 0.0
    %873 = vmatprep.subr.mxu0 0.0
    %874 = vmatpush1.xpose.msra.mxu0 0.0
    %875 = vmatprep.subr.mxu0 0.0
    %876 = vmatpush1.xpose.msra.mxu0 0.0
    %877 = vmatprep.subr.mxu0 0.0
    %878 = vmatpush1.xpose.msra.mxu0 0.0
    %879 = vmatprep.subr.mxu0 0.0
    %880 = vmatpush1.xpose.msra.mxu0 0.0
    %881 = vmatprep.subr.mxu0 0.0
    %882 = vmatpush1.xpose.msra.mxu0 0.0
    %883 = vmatprep.subr.mxu0 0.0
    %884 = vmatpush1.xpose.msra.mxu0 0.0
    %885 = vmatprep.subr.mxu0 0.0
    %886 = vmatpush1.xpose.msra.mxu0 0.0
    %887 = vmatprep.subr.mxu0 0.0
    %888 = vmatpush1.xpose.msra.mxu0 0.0
    %889 = vmatprep.subr.mxu0 0.0
    %890 = vmatpush1.xpose.msra.mxu0 0.0
    %891 = vmatprep.subr.mxu0 0.0
    %892 = vmatpush1.xpose.msra.mxu0 0.0
    %893 = vmatprep.subr.mxu0 0.0
    %894 = vmatpush1.xpose.msra.mxu0 0.0
    %895 = vmatprep.subr.mxu0 0.0
    %896 = vmatpush1.xpose.msra.mxu0 0.0
    %897 = vmatprep.subr.mxu0 0.0
    %898 = vmatpush1.xpose.msra.mxu0 0.0
    %899 = vmatprep.subr.mxu0 0.0
    %900 = vmatpush1.xpose.msra.mxu0 0.0
    %901 = vmatprep.subr.mxu0 0.0
    %902 = vmatpush1.xpose.msra.mxu0 0.0
    %903 = vmatprep.subr.mxu0 0.0
    %904 = vmatpush1.xpose.msra.mxu0 0.0
    %905 = vmatprep.subr.mxu0 0.0
    %906 = vmatpush1.xpose.msra.mxu0 0.0
    %907 = vmatprep.subr.mxu0 0.0
    %908 = vmatpush1.xpose.msra.mxu0 0.0
    %909 = vmatprep.subr.mxu0 0.0
    %910 = vmatpush1.xpose.msra.mxu0 0.0
    %911 = vmatprep.subr.mxu0 0.0
    %912 = vmatpush1.xpose.msra.mxu0 0.0
    %913 = vmatprep.subr.mxu0 0.0
    %914 = vmatpush1.xpose.msra.mxu0 0.0
    %915 = vmatprep.subr.mxu0 0.0
    %916 = vmatpush1.xpose.msra.mxu0 0.0
    %917 = vmatprep.subr.mxu0 0.0
    %918 = vmatpush1.xpose.msra.mxu0 0.0
    %919 = vmatprep.subr.mxu0 0.0
    %920 = vmatpush1.xpose.msra.mxu0 0.0
    %921 = vmatprep.subr.mxu0 0.0
    %922 = vmatpush1.xpose.msra.mxu0 0.0
    %923 = vmatprep.mubr.f32.mxu0 0.0
    %924 = vmatmul.mubr.f32.gmra.mrb[0].mxu0 %v853
    %v925 = vpop.f32.mrb[0].mxu0
    %v926 = vadd.f32 0.0, %v925
    %v927 = vpop.f32.mrb[0].mxu0
    %928 = vmatprep.mubr.f32.mxu0 0.0
    %929 = vmatmul.mubr.f32.gmra.mrb[0].mxu0 %v855
    %v930 = vpop.f32.mrb[0].mxu0
    %v931 = vadd.f32 0.0, %v930
    %v932 = vpop.f32.mrb[0].mxu0
    %933 = vdwg.mxu0
    %v934 = vsel %vm338, %v926, -inf
    %935 = vmax.xlane.f32.xlu0 %v934
    %v936 = vpop.xlane.xlu0 %935
    %v937 = vsel %vm338, %v931, -inf
    %938 = vmax.xlane.f32.xlu0 %v937
    %v939 = vpop.xlane.xlu0 %938
    %v940 = vsub.f32 %v926, %v936
    %v941 = vsub.f32 %v931, %v939
    %v942 = vmul.f32 %v940, 1.442695
    %v943 = vpow.pop %v942
    %v944 = vmul.f32 %v941, 1.442695
    %v945 = vpow.pop %v944
    %v946 = vsel %vm338, %v943, 0.0
    %947 = vadd.xlane.f32.xlu0 %v946
    %v948 = vpop.xlane.xlu0 %947
    %v949 = vsel %vm338, %v945, 0.0
    %950 = vadd.xlane.f32.xlu0 %v949
    %v951 = vpop.xlane.xlu0 %950
    %v952 = vrcp.pop %v948
    %v953 = vmul.f32 %v943, %v952
    %v954 = vrcp.pop %v951
    %v955 = vmul.f32 %v945, %v954
    %956 = vrot.lane.b32.xlu0 %v250, 16
    %v957 = vpop.permute.xlu0 %956
    %v960 = vsel %vm338, %v953, 0
    %v963 = vsel %vm338, %v955, 0
    %965 = vmatprep.subr.mxu0 0.0
    %966 = vmatpush1.msra.mxu0 %v957
    %967 = vmatprep.subr.mxu0 0.0
    %968 = vmatpush1.msra.mxu0 0.0
    %969 = vmatprep.subr.mxu0 0.0
    %970 = vmatpush1.msra.mxu0 0.0
    %971 = vmatprep.subr.mxu0 0.0
    %972 = vmatpush1.msra.mxu0 0.0
    %973 = vmatprep.subr.mxu0 0.0
    %974 = vmatpush1.msra.mxu0 0.0
    %975 = vmatprep.subr.mxu0 0.0
    %976 = vmatpush1.msra.mxu0 0.0
    %977 = vmatprep.subr.mxu0 0.0
    %978 = vmatpush1.msra.mxu0 0.0
    %979 = vmatprep.subr.mxu0 0.0
    %980 = vmatpush1.msra.mxu0 0.0
    %981 = vmatprep.subr.mxu0 0.0
    %982 = vmatpush1.msra.mxu0 0.0
    %983 = vmatprep.subr.mxu0 0.0
    %984 = vmatpush1.msra.mxu0 0.0
    %985 = vmatprep.subr.mxu0 0.0
    %986 = vmatpush1.msra.mxu0 0.0
    %987 = vmatprep.subr.mxu0 0.0
    %988 = vmatpush1.msra.mxu0 0.0
    %989 = vmatprep.subr.mxu0 0.0
    %990 = vmatpush1.msra.mxu0 0.0
    %991 = vmatprep.subr.mxu0 0.0
    %992 = vmatpush1.msra.mxu0 0.0
    %993 = vmatprep.subr.mxu0 0.0
    %994 = vmatpush1.msra.mxu0 0.0
    %995 = vmatprep.subr.mxu0 0.0
    %996 = vmatpush1.msra.mxu0 0.0
    %997 = vmatprep.subr.mxu0 0.0
    %998 = vmatpush1.msra.mxu0 0.0
    %999 = vmatprep.subr.mxu0 0.0
    %1000 = vmatpush1.msra.mxu0 0.0
    %1001 = vmatprep.subr.mxu0 0.0
    %1002 = vmatpush1.msra.mxu0 0.0
    %1003 = vmatprep.subr.mxu0 0.0
    %1004 = vmatpush1.msra.mxu0 0.0
    %1005 = vmatprep.subr.mxu0 0.0
    %1006 = vmatpush1.msra.mxu0 0.0
    %1007 = vmatprep.subr.mxu0 0.0
    %1008 = vmatpush1.msra.mxu0 0.0
    %1009 = vmatprep.subr.mxu0 0.0
    %1010 = vmatpush1.msra.mxu0 0.0
    %1011 = vmatprep.subr.mxu0 0.0
    %1012 = vmatpush1.msra.mxu0 0.0
    %1013 = vmatprep.subr.mxu0 0.0
    %1014 = vmatpush1.msra.mxu0 0.0
    %1015 = vmatprep.subr.mxu0 0.0
    %1016 = vmatpush1.msra.mxu0 0.0
    %1017 = vmatprep.subr.mxu0 0.0
    %1018 = vmatpush1.msra.mxu0 0.0
    %1019 = vmatprep.subr.mxu0 0.0
    %1020 = vmatpush1.msra.mxu0 0.0
    %1021 = vmatprep.subr.mxu0 0.0
    %1022 = vmatpush1.msra.mxu0 0.0
    %1023 = vmatprep.subr.mxu0 0.0
    %1024 = vmatpush1.msra.mxu0 0.0
    %1025 = vmatprep.subr.mxu0 0.0
    %1026 = vmatpush1.msra.mxu0 0.0
    %1027 = vmatprep.subr.mxu0 0.0
    %1028 = vmatpush1.msra.mxu0 0.0
    %1029 = vmatprep.mubr.f32.mxu0 0.0
    %1030 = vmatmul.mubr.f32.gmra.mrb[0].mxu0 %v960
    %v1031 = vpop.f32.mrb[0].mxu0
    %v1032 = vadd.f32 0.0, %v1031
    %v1033 = vpop.f32.mrb[0].mxu0
    %1034 = vmatprep.mubr.f32.mxu0 0.0
    %1035 = vmatmul.mubr.f32.gmra.mrb[0].mxu0 %v963
    %v1036 = vpop.f32.mrb[0].mxu0
    %v1037 = vadd.f32 0.0, %v1036
    %v1038 = vpop.f32.mrb[0].mxu0
    %1039 = vdwg.mxu0
    %1041 = vrot.lane.b32.xlu0 %v844, 16
    %v1042 = vpop.permute.xlu0 %1041
    %1045 = vrot.lane.b32.xlu0 %v1032, 32
    %v1046 = vpop.permute.xlu0 %1045
    %1049 = vrot.lane.b32.xlu0 %v1037, 48
    %v1050 = vpop.permute.xlu0 %1049
    %v1052 = vsel %vm256, %v839, %v1042
    %v1053 = vsel %vm651, %v1052, %v1046
    %v1054 = vsel %vm653, %v1053, %v1050
    %v1055 = vld [vmem:[#allocation7] sm:$0xff]
    %v1056 = vld [vmem:[#allocation7 + $0x8] sm:$0xff]
    %v1057 = vld [vmem:[#allocation7 + $0x10] sm:$0xff]
    %v1058 = vld [vmem:[#allocation7 + $0x18] sm:$0xff]
    %v1059 = vld [vmem:[#allocation7 + $0x20] sm:$0xff]
    %v1060 = vld [vmem:[#allocation7 + $0x28] sm:$0xff]
    %v1061 = vld [vmem:[#allocation7 + $0x30] sm:$0xff]
    %v1062 = vld [vmem:[#allocation7 + $0x38] sm:$0xff]
    %v1064 = vsel %vm114, %v654, 0
    %v1067 = vsel %vm114, %v1054, 0
    %1069 = vmatprep.subr.mxu0 0.0
    %1070 = vmatpush1.msra.mxu0 %v1055
    %1071 = vmatprep.subr.mxu0 0.0
    %1072 = vmatpush1.msra.mxu0 %v1056
    %1073 = vmatprep.subr.mxu0 0.0
    %1074 = vmatpush1.msra.mxu0 %v1057
    %1075 = vmatprep.subr.mxu0 0.0
    %1076 = vmatpush1.msra.mxu0 %v1058
    %1077 = vmatprep.subr.mxu0 0.0
    %1078 = vmatpush1.msra.mxu0 %v1059
    %1079 = vmatprep.subr.mxu0 0.0
    %1080 = vmatpush1.msra.mxu0 %v1060
    %1081 = vmatprep.subr.mxu0 0.0
    %1082 = vmatpush1.msra.mxu0 %v1061
    %1083 = vmatprep.subr.mxu0 0.0
    %1084 = vmatpush1.msra.mxu0 %v1062
    %1085 = vmatprep.subr.mxu0 0.0
    %1086 = vmatpush1.msra.mxu0 0.0
    %1087 = vmatprep.subr.mxu0 0.0
    %1088 = vmatpush1.msra.mxu0 0.0
    %1089 = vmatprep.subr.mxu0 0.0
    %1090 = vmatpush1.msra.mxu0 0.0
    %1091 = vmatprep.subr.mxu0 0.0
    %1092 = vmatpush1.msra.mxu0 0.0
    %1093 = vmatprep.subr.mxu0 0.0
    %1094 = vmatpush1.msra.mxu0 0.0
    %1095 = vmatprep.subr.mxu0 0.0
    %1096 = vmatpush1.msra.mxu0 0.0
    %1097 = vmatprep.subr.mxu0 0.0
    %1098 = vmatpush1.msra.mxu0 0.0
    %1099 = vmatprep.subr.mxu0 0.0
    %1100 = vmatpush1.msra.mxu0 0.0
    %1101 = vmatprep.subr.mxu0 0.0
    %1102 = vmatpush1.msra.mxu0 0.0
    %1103 = vmatprep.subr.mxu0 0.0
    %1104 = vmatpush1.msra.mxu0 0.0
    %1105 = vmatprep.subr.mxu0 0.0
    %1106 = vmatpush1.msra.mxu0 0.0
    %1107 = vmatprep.subr.mxu0 0.0
    %1108 = vmatpush1.msra.mxu0 0.0
    %1109 = vmatprep.subr.mxu0 0.0
    %1110 = vmatpush1.msra.mxu0 0.0
    %1111 = vmatprep.subr.mxu0 0.0
    %1112 = vmatpush1.msra.mxu0 0.0
    %1113 = vmatprep.subr.mxu0 0.0
    %1114 = vmatpush1.msra.mxu0 0.0
    %1115 = vmatprep.subr.mxu0 0.0
    %1116 = vmatpush1.msra.mxu0 0.0
    %1117 = vmatprep.subr.mxu0 0.0
    %1118 = vmatpush1.msra.mxu0 0.0
    %1119 = vmatprep.subr.mxu0 0.0
    %1120 = vmatpush1.msra.mxu0 0.0
    %1121 = vmatprep.subr.mxu0 0.0
    %1122 = vmatpush1.msra.mxu0 0.0
    %1123 = vmatprep.subr.mxu0 0.0
    %1124 = vmatpush1.msra.mxu0 0.0
    %1125 = vmatprep.subr.mxu0 0.0
    %1126 = vmatpush1.msra.mxu0 0.0
    %1127 = vmatprep.subr.mxu0 0.0
    %1128 = vmatpush1.msra.mxu0 0.0
    %1129 = vmatprep.subr.mxu0 0.0
    %1130 = vmatpush1.msra.mxu0 0.0
    %1131 = vmatprep.subr.mxu0 0.0
    %1132 = vmatpush1.msra.mxu0 0.0
    %1133 = vmatprep.mubr.f32.mxu0 0.0
    %1134 = vmatmul.mubr.f32.gmra.mrb[0].mxu0 %v1064
    %v1135 = vpop.f32.mrb[0].mxu0
    %v1136 = vadd.f32 0.0, %v1135
    %v1137 = vpop.f32.mrb[0].mxu0
    %1138 = vmatprep.mubr.f32.mxu0 0.0
    %1139 = vmatmul.mubr.f32.gmra.mrb[0].mxu0 %v1067
    %v1140 = vpop.f32.mrb[0].mxu0
    %v1141 = vadd.f32 0.0, %v1140
    %v1142 = vpop.f32.mrb[0].mxu0
    %1143 = vdwg.mxu0
    %v1144 = vadd.f32 %v109, %v1136
    %v1145 = vadd.f32 %v110, %v1141
    %v1146 = vmul.f32 %v1144, %v1144
    %v1147 = vmul.f32 %v1145, %v1145
    %v1148 = vsel %vm114, %v1146, 0.0
    %1149 = vadd.xlane.f32.xlu0 %v1148
    %v1150 = vpop.xlane.xlu0 %1149
    %v1151 = vsel %vm114, %v1147, 0.0
    %1152 = vadd.xlane.f32.xlu0 %v1151
    %v1153 = vpop.xlane.xlu0 %1152
    %v1154 = vmul.f32 %v1150, %v121
    %v1155 = vmul.f32 %v1153, %v121
    %v1156 = vadd.f32 %v1154, 1e-05
    %v1157 = vadd.f32 %v1155, 1e-05
    %v1158 = vrsqrt.pop %v1156
    %v1159 = vrsqrt.pop %v1157
    %v1160 = vmul.f32 %v1144, %v1158
    %v1161 = vmul.f32 %v1145, %v1159
    %v1162 = vlaneseq
    %v1163 = vshrl.u32 %v1162, 7
    %v1164 = vsub.s32 1, %v1163
    %v1165 = vrot.slane %v111, %v1164
    %v1166 = vmul.f32 %v1160, %v1165
    %v1167 = vmul.f32 %v1161, %v1165
    %v1168 = vld [vmem:[#allocation8] sm:$0xff]
    %v1169 = vld [vmem:[#allocation8 + $0x8] sm:$0xff]
    %v1170 = vld [vmem:[#allocation8 + $0x10] sm:$0xff]
    %v1171 = vld [vmem:[#allocation8 + $0x18] sm:$0xff]
    %v1172 = vld [vmem:[#allocation8 + $0x20] sm:$0xff]
    %v1173 = vld [vmem:[#allocation8 + $0x28] sm:$0xff]
    %v1174 = vld [vmem:[#allocation8 + $0x30] sm:$0xff]
    %v1175 = vld [vmem:[#allocation8 + $0x38] sm:$0xff]
    %v1177 = vsel %vm114, %v1166, 0
    %v1180 = vsel %vm114, %v1167, 0
    %1182 = vmatprep.subr.mxu0 0.0
    %1183 = vmatpush1.msra.mxu0 %v1168
    %1184 = vmatprep.subr.mxu0 0.0
    %1185 = vmatpush1.msra.mxu0 %v1169
    %1186 = vmatprep.subr.mxu0 0.0
    %1187 = vmatpush1.msra.mxu0 %v1170
    %1188 = vmatprep.subr.mxu0 0.0
    %1189 = vmatpush1.msra.mxu0 %v1171
    %1190 = vmatprep.subr.mxu0 0.0
    %1191 = vmatpush1.msra.mxu0 %v1172
    %1192 = vmatprep.subr.mxu0 0.0
    %1193 = vmatpush1.msra.mxu0 %v1173
    %1194 = vmatprep.subr.mxu0 0.0
    %1195 = vmatpush1.msra.mxu0 %v1174
    %1196 = vmatprep.subr.mxu0 0.0
    %1197 = vmatpush1.msra.mxu0 %v1175
    %1198 = vmatprep.subr.mxu0 0.0
    %1199 = vmatpush1.msra.mxu0 0.0
    %1200 = vmatprep.subr.mxu0 0.0
    %1201 = vmatpush1.msra.mxu0 0.0
    %1202 = vmatprep.subr.mxu0 0.0
    %1203 = vmatpush1.msra.mxu0 0.0
    %1204 = vmatprep.subr.mxu0 0.0
    %1205 = vmatpush1.msra.mxu0 0.0
    %1206 = vmatprep.subr.mxu0 0.0
    %1207 = vmatpush1.msra.mxu0 0.0
    %1208 = vmatprep.subr.mxu0 0.0
    %1209 = vmatpush1.msra.mxu0 0.0
    %1210 = vmatprep.subr.mxu0 0.0
    %1211 = vmatpush1.msra.mxu0 0.0
    %1212 = vmatprep.subr.mxu0 0.0
    %1213 = vmatpush1.msra.mxu0 0.0
    %1214 = vmatprep.subr.mxu0 0.0
    %1215 = vmatpush1.msra.mxu0 0.0
    %1216 = vmatprep.subr.mxu0 0.0
    %1217 = vmatpush1.msra.mxu0 0.0
    %1218 = vmatprep.subr.mxu0 0.0
    %1219 = vmatpush1.msra.mxu0 0.0
    %1220 = vmatprep.subr.mxu0 0.0
    %1221 = vmatpush1.msra.mxu0 0.0
    %1222 = vmatprep.subr.mxu0 0.0
    %1223 = vmatpush1.msra.mxu0 0.0
    %1224 = vmatprep.subr.mxu0 0.0
    %1225 = vmatpush1.msra.mxu0 0.0
    %1226 = vmatprep.subr.mxu0 0.0
    %1227 = vmatpush1.msra.mxu0 0.0
    %1228 = vmatprep.subr.mxu0 0.0
    %1229 = vmatpush1.msra.mxu0 0.0
    %1230 = vmatprep.subr.mxu0 0.0
    %1231 = vmatpush1.msra.mxu0 0.0
    %1232 = vmatprep.subr.mxu0 0.0
    %1233 = vmatpush1.msra.mxu0 0.0
    %1234 = vmatprep.subr.mxu0 0.0
    %1235 = vmatpush1.msra.mxu0 0.0
    %1236 = vmatprep.subr.mxu0 0.0
    %1237 = vmatpush1.msra.mxu0 0.0
    %1238 = vmatprep.subr.mxu0 0.0
    %1239 = vmatpush1.msra.mxu0 0.0
    %1240 = vmatprep.subr.mxu0 0.0
    %1241 = vmatpush1.msra.mxu0 0.0
    %1242 = vmatprep.subr.mxu0 0.0
    %1243 = vmatpush1.msra.mxu0 0.0
    %1244 = vmatprep.subr.mxu0 0.0
    %1245 = vmatpush1.msra.mxu0 0.0
    %1246 = vmatprep.mubr.f32.mxu0 0.0
    %1247 = vmatmul.mubr.f32.gmra.mrb[0].mxu0 %v1177
    %v1248 = vpop.f32.mrb[0].mxu0
    %v1249 = vadd.f32 0.0, %v1248
    %v1250 = vpop.f32.mrb[0].mxu0
    %1251 = vmatprep.mubr.f32.mxu0 0.0
    %1252 = vmatmul.mubr.f32.gmra.mrb[0].mxu0 %v1180
    %v1253 = vpop.f32.mrb[0].mxu0
    %v1254 = vadd.f32 0.0, %v1253
    %v1255 = vpop.f32.mrb[0].mxu0
    %1256 = vdwg.mxu0
    %v1257 = vxor.u32 %v1249, 2147483648
    %v1258 = vxor.u32 %v1254, 2147483648
    %v1259 = vmul.f32 %v1257, 1.442695
    %v1260 = vpow.pop %v1259
    %v1261 = vmul.f32 %v1258, 1.442695
    %v1262 = vpow.pop %v1261
    %v1263 = vadd.f32 %v1260, 1.0
    %v1264 = vadd.f32 %v1262, 1.0
    %v1265 = vrcp.pop %v1263
    %v1266 = vmul.f32 1.0, %v1265
    %v1267 = vrcp.pop %v1264
    %v1268 = vmul.f32 1.0, %v1267
    %v1269 = vmul.f32 %v1249, %v1266
    %v1270 = vmul.f32 %v1254, %v1268
    %1273 = vrot.lane.b32.xlu0 %v1249, 64
    %v1274 = vpop.permute.xlu0 %1273
    %1275 = vrot.lane.b32.xlu0 %v1254, 64
    %v1276 = vpop.permute.xlu0 %1275
    %v1279 = vmul.f32 %v1269, %v1274
    %v1280 = vmul.f32 %v1270, %v1276
    %v1281 = vld [vmem:[#allocation10] sm:$0xff]
    %v1282 = vld [vmem:[#allocation10 + $0x8] sm:$0xff]
    %v1283 = vld [vmem:[#allocation10 + $0x10] sm:$0xff]
    %v1284 = vld [vmem:[#allocation10 + $0x18] sm:$0xff]
    %v1285 = vld [vmem:[#allocation10 + $0x20] sm:$0xff]
    %v1286 = vld [vmem:[#allocation10 + $0x28] sm:$0xff]
    %v1287 = vld [vmem:[#allocation10 + $0x30] sm:$0xff]
    %v1288 = vld [vmem:[#allocation10 + $0x38] sm:$0xff]
    %v1290 = vsel %vm114, %v1279, 0
    %v1293 = vsel %vm114, %v1280, 0
    %1295 = vmatprep.subr.mxu0 0.0
    %1296 = vmatpush1.msra.mxu0 %v1281
    %1297 = vmatprep.subr.mxu0 0.0
    %1298 = vmatpush1.msra.mxu0 %v1282
    %1299 = vmatprep.subr.mxu0 0.0
    %1300 = vmatpush1.msra.mxu0 %v1283
    %1301 = vmatprep.subr.mxu0 0.0
    %1302 = vmatpush1.msra.mxu0 %v1284
    %1303 = vmatprep.subr.mxu0 0.0
    %1304 = vmatpush1.msra.mxu0 %v1285
    %1305 = vmatprep.subr.mxu0 0.0
    %1306 = vmatpush1.msra.mxu0 %v1286
    %1307 = vmatprep.subr.mxu0 0.0
    %1308 = vmatpush1.msra.mxu0 %v1287
    %1309 = vmatprep.subr.mxu0 0.0
    %1310 = vmatpush1.msra.mxu0 %v1288
    %1311 = vmatprep.subr.mxu0 0.0
    %1312 = vmatpush1.msra.mxu0 0.0
    %1313 = vmatprep.subr.mxu0 0.0
    %1314 = vmatpush1.msra.mxu0 0.0
    %1315 = vmatprep.subr.mxu0 0.0
    %1316 = vmatpush1.msra.mxu0 0.0
    %1317 = vmatprep.subr.mxu0 0.0
    %1318 = vmatpush1.msra.mxu0 0.0
    %1319 = vmatprep.subr.mxu0 0.0
    %1320 = vmatpush1.msra.mxu0 0.0
    %1321 = vmatprep.subr.mxu0 0.0
    %1322 = vmatpush1.msra.mxu0 0.0
    %1323 = vmatprep.subr.mxu0 0.0
    %1324 = vmatpush1.msra.mxu0 0.0
    %1325 = vmatprep.subr.mxu0 0.0
    %1326 = vmatpush1.msra.mxu0 0.0
    %1327 = vmatprep.subr.mxu0 0.0
    %1328 = vmatpush1.msra.mxu0 0.0
    %1329 = vmatprep.subr.mxu0 0.0
    %1330 = vmatpush1.msra.mxu0 0.0
    %1331 = vmatprep.subr.mxu0 0.0
    %1332 = vmatpush1.msra.mxu0 0.0
    %1333 = vmatprep.subr.mxu0 0.0
    %1334 = vmatpush1.msra.mxu0 0.0
    %1335 = vmatprep.subr.mxu0 0.0
    %1336 = vmatpush1.msra.mxu0 0.0
    %1337 = vmatprep.subr.mxu0 0.0
    %1338 = vmatpush1.msra.mxu0 0.0
    %1339 = vmatprep.subr.mxu0 0.0
    %1340 = vmatpush1.msra.mxu0 0.0
    %1341 = vmatprep.subr.mxu0 0.0
    %1342 = vmatpush1.msra.mxu0 0.0
    %1343 = vmatprep.subr.mxu0 0.0
    %1344 = vmatpush1.msra.mxu0 0.0
    %1345 = vmatprep.subr.mxu0 0.0
    %1346 = vmatpush1.msra.mxu0 0.0
    %1347 = vmatprep.subr.mxu0 0.0
    %1348 = vmatpush1.msra.mxu0 0.0
    %1349 = vmatprep.subr.mxu0 0.0
    %1350 = vmatpush1.msra.mxu0 0.0
    %1351 = vmatprep.subr.mxu0 0.0
    %1352 = vmatpush1.msra.mxu0 0.0
    %1353 = vmatprep.subr.mxu0 0.0
    %1354 = vmatpush1.msra.mxu0 0.0
    %1355 = vmatprep.subr.mxu0 0.0
    %1356 = vmatpush1.msra.mxu0 0.0
    %1357 = vmatprep.subr.mxu0 0.0
    %1358 = vmatpush1.msra.mxu0 0.0
    %1359 = vmatprep.mubr.f32.mxu0 0.0
    %1360 = vmatmul.mubr.f32.gmra.mrb[0].mxu0 %v1290
    %v1361 = vpop.f32.mrb[0].mxu0
    %v1362 = vadd.f32 0.0, %v1361
    %v1363 = vpop.f32.mrb[0].mxu0
    %1364 = vmatprep.mubr.f32.mxu0 0.0
    %1365 = vmatmul.mubr.f32.gmra.mrb[0].mxu0 %v1293
    %v1366 = vpop.f32.mrb[0].mxu0
    %v1367 = vadd.f32 0.0, %v1366
    %v1368 = vpop.f32.mrb[0].mxu0
    %1369 = vdwg.mxu0
    %1370 = vst.msk [vmem:[#allocation13] sm:$0xff] %vm114, %v1362
    %1371 = vst.msk [vmem:[#allocation13 + $0x8] sm:$0xff] %vm114, %v1367
    // Predicated region
    $region54: #{encoder_block.1} parent=1 // pred_check
      _
    $region55: #{encoder_block.1} parent=1 // pred_check_branch
      %1373 = sbr.rel (0) target = $region57
    $region56: #{encoder_block.1} parent=1 // pred_region
      %s1375 = ssub.s32 256, 256
      %1376 = vsyncadd [#allocation4], %s1375
      %s1377 = sshll.u32 [#allocation13], 4
      %s1378 = int_to_ptr.vmem [resolvable:$true] %s1377
      %1383 = dma.vmem_to_hbm [thread:$0]  %s1378, 256, %s7, [#allocation4], 128, 128, 8
    $region57: #{encoder_block.1} parent=1 // pred_fallthru
      _
    // Predicated region
    $region58: #{encoder_block.1} parent=1 // pred_check
      _
    $region59: #{encoder_block.1} parent=1 // pred_check_branch
      %1385 = sbr.rel (0) target = $region61
    $region60: #{encoder_block.1} parent=1 // pred_region
      %1386 = dma.done [#allocation4], 256
    $region61: #{encoder_block.1} parent=1 // pred_fallthru
      _
    %1387 = vsyncpa [#allocation3], 1
    %1388 = vsyncpa [#allocation6], 1
    %1389 = vsyncpa [#allocation9], 1
    %1390 = vsyncpa [#allocation12], 1
    %1391 = vsyncpa [#allocation4], 1

</llo_original>
